<compile_context>
chip_gen: v7x
topology: tpu7x:2x2x1
jax: 0.10.0
libtpu: 0.0.40
codegen_flags: <defaults>
</compile_context>

<pallas_src>
import functools

import jax
import jax.numpy as jnp
from jax.experimental import pallas as pl
from jax.experimental.pallas import tpu as pltpu

NEG_SLOPE = 0.2       # GATConv default negative_slope
LANE = 128            # TPU lane width
MASK_BIG = 1e9        # additive-mask magnitude (f32-safe; exp underflows to 0)


def _round_up(v, m):
    return (v + m - 1) // m * m


def fused_gat_kernel(adj_ref, x_ref, w1_ref, b1_ref, w2_ref, b2_ref, out_ref,
                     h1_acc, *, hid, c_out):
    k = pl.program_id(0)

    @pl.when(k == 0)
    def _():
        h1_acc[...] = jnp.zeros_like(h1_acc)

    # Layer-1 projection, K-tiled over the (padded) feature dim.
    # bf16 operands, f32 accumulation.
    h1_acc[...] += jnp.dot(x_ref[...], w1_ref[...],
                           preferred_element_type=jnp.float32)

    @pl.when(k == pl.num_programs(0) - 1)
    def _():
        # Additive attention mask built in-kernel from the int8 adjacency:
        # 0 on edges / self-loops, -1e9 elsewhere (exp underflows to exactly 0).
        mask = (adj_ref[...].astype(jnp.float32) - 1.0) * MASK_BIG

        def gat_layer(h, s_col):
            # h: [Np, 128] f32; columns s_col / s_col+1 hold the att_src /
            # att_dst scores folded into the projection weights.
            s_dst = h[:, s_col + 1:s_col + 2]                    # [Np, 1]
            # Source-score ROW via a transposed-contraction matmul (MXU)
            # against a one-hot selector -- avoids the narrow-column
            # transpose (XLU relayout) on the critical path.
            sel = (jax.lax.broadcasted_iota(jnp.int32, (8, LANE), 1)
                   == s_col).astype(jnp.float32)
            s_src_row = jax.lax.dot_general(
                sel, h, (((1,), (1,)), ((), ())),
                preferred_element_type=jnp.float32)[0:1, :]      # [1, Np]
            e = s_dst + s_src_row                                # [Np, Np]
            e = jnp.maximum(e, NEG_SLOPE * e)                    # LeakyReLU
            logits = e + mask                                    # f32
            m = jnp.max(logits, axis=-1, keepdims=True)
            p = jnp.exp(logits - m)                              # masked -> 0
            denom = jnp.sum(p, axis=-1, keepdims=True)
            # Aggregate the UNnormalized probabilities on the MXU in bf16,
            # then scale rows by 1/denom (EUP approx reciprocal): no
            # materialized [Np, Np] alpha and no N^2 divide.
            agg = jnp.dot(p.astype(jnp.bfloat16), h.astype(jnp.bfloat16),
                          preferred_element_type=jnp.float32)
            return agg * pl.reciprocal(denom, approx=True)

        # ------------------------------ layer 1 ------------------------------
        h1 = h1_acc[...]
        z1 = gat_layer(h1, hid) + b1_ref[...]
        z1 = jnp.maximum(z1, 0.0)                                # ReLU
        # TODO(synk): F.dropout(p=0.5) is identity in eval mode; training-mode
        # stochastic dropout is not modelled here.

        # ------------------------------ layer 2 ------------------------------
        h2 = jnp.dot(z1.astype(jnp.bfloat16), w2_ref[...],
                     preferred_element_type=jnp.float32)
        out_ref[...] = gat_layer(h2, c_out) + b2_ref[...]


def prepare_gat(params, adj):
    """One-time preprocessing (hoisted out of the per-call path).

    Folds att_src/att_dst into the projection weights as two extra columns,
    pads everything to 128 lanes, casts MXU operands to bf16, and builds the
    padded int8 adjacency with self-loops (GATConv add_self_loops=True; padded
    rows get a self-loop so their discarded softmax rows stay finite).
    """
    (w1, asrc1, adst1, b1, w2, asrc2, adst2, b2) = params
    f_in, hid = w1.shape
    c_out = w2.shape[1]
    n = adj.shape[0]
    assert hid + 2 <= LANE and c_out + 2 <= LANE

    n_p = _round_up(n, LANE)
    if f_in > 512:
        f_p = _round_up(f_in, 512)        # K-tiles of 512 for large feature dims
    else:
        f_p = _round_up(f_in, LANE)       # single K-tile

    w1_full = jnp.concatenate([w1, w1 @ asrc1.T, w1 @ adst1.T], axis=1)
    w1_p = (jnp.zeros((f_p, LANE), jnp.float32)
            .at[:f_in, :hid + 2].set(w1_full).astype(jnp.bfloat16))
    b1_p = jnp.zeros((1, LANE), jnp.float32).at[:, :hid].set(b1)

    w2_full = jnp.concatenate([w2, w2 @ asrc2.T, w2 @ adst2.T], axis=1)
    w2_p = (jnp.zeros((LANE, LANE), jnp.float32)
            .at[:hid, :c_out + 2].set(w2_full).astype(jnp.bfloat16))
    b2_p = jnp.zeros((1, LANE), jnp.float32).at[:, :c_out].set(b2)

    adj_p = jnp.zeros((n_p, n_p), jnp.float32).at[:n, :n].set(adj)
    diag = jnp.arange(n_p)
    adj_p = adj_p.at[diag, diag].set(1.0)
    adj_i8 = adj_p.astype(jnp.int8)       # 4x less mask DMA / VMEM than f32

    return adj_i8, w1_p, b1_p, w2_p, b2_p, hid, c_out


@functools.partial(jax.jit, static_argnames=("hid", "c_out"))
def gat_forward(x, adj_i8, w1_p, b1_p, w2_p, b2_p, *, hid, c_out):
    n, f_in = x.shape
    n_p = adj_i8.shape[0]
    f_p = w1_p.shape[0]
    tk = 512 if f_p > 512 else f_p        # consistent with prepare_gat

    # Only per-call work: pad + bf16-cast the node features.
    x_p = (jnp.zeros((n_p, f_p), jnp.bfloat16)
           .at[:n, :f_in].set(x.astype(jnp.bfloat16)))

    kernel = functools.partial(fused_gat_kernel, hid=hid, c_out=c_out)
    out_p = pl.pallas_call(
        kernel,
        out_shape=jax.ShapeDtypeStruct((n_p, LANE), jnp.float32),
        grid_spec=pltpu.PrefetchScalarGridSpec(
            num_scalar_prefetch=0,
            grid=(f_p // tk,),
            in_specs=[
                pl.BlockSpec((n_p, n_p), lambda k: (0, 0)),     # adj (int8)
                pl.BlockSpec((n_p, tk), lambda k: (0, k)),      # x   (bf16)
                pl.BlockSpec((tk, LANE), lambda k: (k, 0)),     # w1  (bf16)
                pl.BlockSpec((1, LANE), lambda k: (0, 0)),      # b1  (f32)
                pl.BlockSpec((LANE, LANE), lambda k: (0, 0)),   # w2  (bf16)
                pl.BlockSpec((1, LANE), lambda k: (0, 0)),      # b2  (f32)
            ],
            out_specs=pl.BlockSpec((n_p, LANE), lambda k: (0, 0)),
            scratch_shapes=[pltpu.VMEM((n_p, LANE), jnp.float32)],
        ),
        compiler_params=pltpu.CompilerParams(
            dimension_semantics=("arbitrary",),   # K is a reduction axis
            vmem_limit_bytes=32 * 1024 * 1024,
        ),
    )(adj_i8, x_p, w1_p, b1_p, w2_p, b2_p)
    return out_p[:n, :c_out]


# ----------------------------- pure-JAX reference -----------------------------
def gat_conv_ref(x, w, att_src, att_dst, bias, adj, apply_relu):
    h = x @ w
    s_src = jnp.sum(h * att_src, axis=-1, keepdims=True)
    s_dst = jnp.sum(h * att_dst, axis=-1, keepdims=True)
    e = s_dst + s_src.T
    e = jnp.where(e > 0, e, NEG_SLOPE * e)
    masked = jnp.where(adj > 0, e, -1e30)
    m = jnp.max(masked, axis=-1, keepdims=True)
    p = jnp.where(adj > 0, jnp.exp(masked - m), 0.0)
    alpha = p / jnp.sum(p, axis=-1, keepdims=True)
    out = alpha @ h + bias
    return jnp.maximum(out, 0.0) if apply_relu else out


def gat_forward_ref(x, adj, params):
    (w1, asrc1, adst1, b1, w2, asrc2, adst2, b2) = params
    h = gat_conv_ref(x, w1, asrc1, adst1, b1, adj, True)
    return gat_conv_ref(h, w2, asrc2, adst2, b2, adj, False)


if __name__ == "__main__":
    # Small synthetic stand-in for WebKB/Cornell (real: N=183, F=1703, C=5).
    N = 32          # nodes
    F_IN = 64       # num_features
    HID = 16        # hidden_channels
    C = 5           # num_classes
    E = 96          # number of directed edges

    keys = jax.random.split(jax.random.PRNGKey(0), 12)

    # Node features, row-normalized (NormalizeFeatures transform).
    x = jnp.abs(jax.random.normal(keys[0], (N, F_IN), jnp.float32))
    x = x / jnp.clip(jnp.sum(x, axis=-1, keepdims=True), 1e-12, None)

    # edge_index [2, E]: row 0 = source, row 1 = target -> dense adjacency
    # adj[target, source] plus self-loops (GATConv add_self_loops=True).
    src = jax.random.randint(keys[1], (E,), 0, N)
    dst = jax.random.randint(keys[2], (E,), 0, N)
    adj = jnp.zeros((N, N), jnp.float32).at[dst, src].set(1.0)
    adj = adj.at[jnp.arange(N), jnp.arange(N)].set(1.0)

    # Deterministic parameter init (Glorot-uniform-like).
    def glorot(key, shape):
        lim = jnp.sqrt(6.0 / (shape[0] + shape[1]))
        return jax.random.uniform(key, shape, jnp.float32, -lim, lim)

    w1 = glorot(keys[3], (F_IN, HID))
    asrc1 = glorot(keys[4], (1, HID))
    adst1 = glorot(keys[5], (1, HID))
    b1 = jnp.zeros((1, HID), jnp.float32)

    w2 = glorot(keys[6], (HID, C))
    asrc2 = glorot(keys[7], (1, C))
    adst2 = glorot(keys[8], (1, C))
    b2 = jnp.zeros((1, C), jnp.float32)

    params = (w1, asrc1, adst1, b1, w2, asrc2, adst2, b2)

    # One-time preprocessing (hoisted out of the per-call path).
    adj_i8, w1_p, b1_p, w2_p, b2_p, hid, c_out = prepare_gat(params, adj)

    out = jax.block_until_ready(
        gat_forward(x, adj_i8, w1_p, b1_p, w2_p, b2_p, hid=hid, c_out=c_out))
    ref = gat_forward_ref(x, adj, params)

    assert out.shape == (N, C)
    # Tolerance covers intentional bf16 MXU operands, approx reciprocal, and
    # the folded-projection associativity change.
    max_err = float(jnp.max(jnp.abs(out - ref)))
    assert jnp.allclose(out, ref, atol=5e-3, rtol=5e-2), (
        f"mismatch vs reference (max abs err {max_err})")

    print("KERNEL_OK")
</pallas_src>

<mosaic_0001>
module attributes {stable_mosaic.version = 11 : i64} {
  func.func @fused_gat_kernel(%arg0: i32, %arg1: memref<128x128xi8, #tpu.memory_space<vmem>>, %arg2: memref<128x128xbf16, #tpu.memory_space<vmem>>, %arg3: memref<128x128xbf16, #tpu.memory_space<vmem>>, %arg4: memref<1x128xf32, #tpu.memory_space<vmem>>, %arg5: memref<128x128xbf16, #tpu.memory_space<vmem>>, %arg6: memref<1x128xf32, #tpu.memory_space<vmem>>, %arg7: memref<128x128xf32, #tpu.memory_space<vmem>>, %arg8: memref<128x128xf32, #tpu.memory_space<vmem>>) attributes {dimension_semantics = [#tpu.dimension_semantics<arbitrary>], iteration_bounds = array<i64: 1>, scalar_prefetch = 0 : i64, scratch_operands = 1 : i64, tpu.core_type = #tpu.core_type<tc>, window_params = [{pipeline_mode = #tpu.pipeline_mode<synchronous>, transform_indices = @transform_0, window_bounds = array<i64: 128, 128>}, {transform_indices = @transform_1, window_bounds = array<i64: 128, 128>}, {transform_indices = @transform_2, window_bounds = array<i64: 128, 128>}, {pipeline_mode = #tpu.pipeline_mode<synchronous>, transform_indices = @transform_3, window_bounds = array<i64: 1, 128>}, {pipeline_mode = #tpu.pipeline_mode<synchronous>, transform_indices = @transform_4, window_bounds = array<i64: 128, 128>}, {pipeline_mode = #tpu.pipeline_mode<synchronous>, transform_indices = @transform_5, window_bounds = array<i64: 1, 128>}, {pipeline_mode = #tpu.pipeline_mode<synchronous>, transform_indices = @transform_6, window_bounds = array<i64: 128, 128>}]} {
    %c0_i32 = arith.constant 0 : i32
    %0 = arith.cmpi eq, %arg0, %c0_i32 : i32
    %1 = arith.extui %0 : i1 to i32
    %c0_i32_0 = arith.constant 0 : i32
    %2 = arith.cmpi ne, %1, %c0_i32_0 : i32
    scf.if %2 {
      %cst_10 = arith.constant 0.000000e+00 : f32
      %12 = vector.broadcast %cst_10 : f32 to vector<128x128xf32>
      %c0_11 = arith.constant 0 : index
      %c0_12 = arith.constant 0 : index
      %13 = vector.load %arg8[%c0_11, %c0_12] : memref<128x128xf32, #tpu.memory_space<vmem>>, vector<128x128xf32>
      tpu.vector_store %arg8[%c0_11, %c0_12], %12 {strides = array<i32>} : memref<128x128xf32, #tpu.memory_space<vmem>>, vector<128x128xf32>,
    } else {
    }
    %c0 = arith.constant 0 : index
    %c0_1 = arith.constant 0 : index
    %3 = vector.load %arg8[%c0, %c0_1] : memref<128x128xf32, #tpu.memory_space<vmem>>, vector<128x128xf32>
    %c0_2 = arith.constant 0 : index
    %c0_3 = arith.constant 0 : index
    %4 = vector.load %arg2[%c0_2, %c0_3] : memref<128x128xbf16, #tpu.memory_space<vmem>>, vector<128x128xbf16>
    %c0_4 = arith.constant 0 : index
    %c0_5 = arith.constant 0 : index
    %5 = vector.load %arg3[%c0_4, %c0_5] : memref<128x128xbf16, #tpu.memory_space<vmem>>, vector<128x128xbf16>
    %cst = arith.constant dense<0.000000e+00> : vector<128x128xf32>
    %6 = tpu.matmul %4, %5, %cst {dimension_numbers = #tpu.dot_dimension_numbers<[1], [0], [0], [1], [0, 0, 1, 1], [], []>} : vector<128x128xbf16>, vector<128x128xbf16>, vector<128x128xf32> -> vector<128x128xf32>
    %7 = arith.addf %3, %6 : vector<128x128xf32>
    %c0_6 = arith.constant 0 : index
    %c0_7 = arith.constant 0 : index
    %8 = vector.load %arg8[%c0_6, %c0_7] : memref<128x128xf32, #tpu.memory_space<vmem>>, vector<128x128xf32>
    tpu.vector_store %arg8[%c0_6, %c0_7], %7 {strides = array<i32>} : memref<128x128xf32, #tpu.memory_space<vmem>>, vector<128x128xf32>,
    %c0_i32_8 = arith.constant 0 : i32
    %9 = arith.cmpi eq, %arg0, %c0_i32_8 : i32
    %10 = arith.extui %9 : i1 to i32
    %c0_i32_9 = arith.constant 0 : i32
    %11 = arith.cmpi ne, %10, %c0_i32_9 : i32
    scf.if %11 {
      %c0_10 = arith.constant 0 : index
      %c0_11 = arith.constant 0 : index
      %12 = vector.load %arg1[%c0_10, %c0_11] : memref<128x128xi8, #tpu.memory_space<vmem>>, vector<128x128xi8>
      %13 = arith.sitofp %12 : vector<128x128xi8> to vector<128x128xf32>
      %cst_12 = arith.constant 1.000000e+00 : f32
      %14 = vector.broadcast %cst_12 : f32 to vector<128x128xf32>
      %15 = arith.subf %13, %14 : vector<128x128xf32>
      %cst_13 = arith.constant 1.000000e+09 : f32
      %16 = vector.broadcast %cst_13 : f32 to vector<128x128xf32>
      %17 = arith.mulf %15, %16 : vector<128x128xf32>
      %c0_14 = arith.constant 0 : index
      %c0_15 = arith.constant 0 : index
      %18 = vector.load %arg8[%c0_14, %c0_15] : memref<128x128xf32, #tpu.memory_space<vmem>>, vector<128x128xf32>
      %19 = vector.extract_strided_slice %18 {offsets = [0, 17], sizes = [128, 1], strides = [1, 1]} : vector<128x128xf32> to vector<128x1xf32>
      %20 = tpu.iota {dimensions = array<i32: 1>} : vector<8x128xi32>
      %c16_i32 = arith.constant 16 : i32
      %21 = vector.broadcast %c16_i32 : i32 to vector<8x128xi32>
      %22 = arith.cmpi eq, %20, %21 : vector<8x128xi32>
      %23 = arith.extui %22 : vector<8x128xi1> to vector<8x128xi32>
      %24 = arith.sitofp %23 : vector<8x128xi32> to vector<8x128xf32>
      %cst_16 = arith.constant dense<0.000000e+00> : vector<8x128xf32>
      %25 = tpu.matmul %24, %18, %cst_16 {dimension_numbers = #tpu.dot_dimension_numbers<[1], [1], [0], [0], [0, 0, 1, 0], [], []>} : vector<8x128xf32>, vector<128x128xf32>, vector<8x128xf32> -> vector<8x128xf32>
      %26 = vector.extract_strided_slice %25 {offsets = [0, 0], sizes = [1, 128], strides = [1, 1]} : vector<8x128xf32> to vector<1x128xf32>
      %27 = vector.broadcast %19 : vector<128x1xf32> to vector<128x128xf32>
      %28 = vector.broadcast %26 : vector<1x128xf32> to vector<128x128xf32>
      %29 = arith.addf %27, %28 : vector<128x128xf32>
      %cst_17 = arith.constant 2.000000e-01 : f32
      %30 = vector.broadcast %cst_17 : f32 to vector<128x128xf32>
      %31 = arith.mulf %30, %29 : vector<128x128xf32>
      %32 = arith.maximumf %29, %31 : vector<128x128xf32>
      %33 = arith.addf %32, %17 : vector<128x128xf32>
      %cst_18 = arith.constant dense<0xFF800000> : vector<128xf32>
      %34 = vector.multi_reduction <maximumf>, %33, %cst_18 [1] : vector<128x128xf32> to vector<128xf32>
      %35 = vector.shape_cast %34 : vector<128xf32> to vector<128x1xf32>
      %36 = vector.broadcast %35 : vector<128x1xf32> to vector<128x128xf32>
      %37 = arith.subf %33, %36 : vector<128x128xf32>
      %38 = math.exp %37 : vector<128x128xf32>
      %cst_19 = arith.constant dense<0.000000e+00> : vector<128xf32>
      %39 = vector.multi_reduction <add>, %38, %cst_19 [1] : vector<128x128xf32> to vector<128xf32>
      %40 = vector.shape_cast %39 : vector<128xf32> to vector<128x1xf32>
      %41 = arith.truncf %38 : vector<128x128xf32> to vector<128x128xbf16>
      %42 = arith.truncf %18 : vector<128x128xf32> to vector<128x128xbf16>
      %cst_20 = arith.constant dense<0.000000e+00> : vector<128x128xf32>
      %43 = tpu.matmul %41, %42, %cst_20 {dimension_numbers = #tpu.dot_dimension_numbers<[1], [0], [0], [1], [0, 0, 1, 1], [], []>} : vector<128x128xbf16>, vector<128x128xbf16>, vector<128x128xf32> -> vector<128x128xf32>
      %44 = tpu.reciprocal %40 {approx = true} : vector<128x1xf32> -> vector<128x1xf32>
      %45 = vector.broadcast %44 : vector<128x1xf32> to vector<128x128xf32>
      %46 = arith.mulf %43, %45 : vector<128x128xf32>
      %c0_21 = arith.constant 0 : index
      %c0_22 = arith.constant 0 : index
      %47 = vector.load %arg4[%c0_21, %c0_22] : memref<1x128xf32, #tpu.memory_space<vmem>>, vector<1x128xf32>
      %48 = vector.broadcast %47 : vector<1x128xf32> to vector<128x128xf32>
      %49 = arith.addf %46, %48 : vector<128x128xf32>
      %cst_23 = arith.constant 0.000000e+00 : f32
      %50 = vector.broadcast %cst_23 : f32 to vector<128x128xf32>
      %51 = arith.maximumf %49, %50 : vector<128x128xf32>
      %52 = arith.truncf %51 : vector<128x128xf32> to vector<128x128xbf16>
      %c0_24 = arith.constant 0 : index
      %c0_25 = arith.constant 0 : index
      %53 = vector.load %arg5[%c0_24, %c0_25] : memref<128x128xbf16, #tpu.memory_space<vmem>>, vector<128x128xbf16>
      %cst_26 = arith.constant dense<0.000000e+00> : vector<128x128xf32>
      %54 = tpu.matmul %52, %53, %cst_26 {dimension_numbers = #tpu.dot_dimension_numbers<[1], [0], [0], [1], [0, 0, 1, 1], [], []>} : vector<128x128xbf16>, vector<128x128xbf16>, vector<128x128xf32> -> vector<128x128xf32>
      %55 = vector.extract_strided_slice %54 {offsets = [0, 6], sizes = [128, 1], strides = [1, 1]} : vector<128x128xf32> to vector<128x1xf32>
      %56 = tpu.iota {dimensions = array<i32: 1>} : vector<8x128xi32>
      %c5_i32 = arith.constant 5 : i32
      %57 = vector.broadcast %c5_i32 : i32 to vector<8x128xi32>
      %58 = arith.cmpi eq, %56, %57 : vector<8x128xi32>
      %59 = arith.extui %58 : vector<8x128xi1> to vector<8x128xi32>
      %60 = arith.sitofp %59 : vector<8x128xi32> to vector<8x128xf32>
      %cst_27 = arith.constant dense<0.000000e+00> : vector<8x128xf32>
      %61 = tpu.matmul %60, %54, %cst_27 {dimension_numbers = #tpu.dot_dimension_numbers<[1], [1], [0], [0], [0, 0, 1, 0], [], []>} : vector<8x128xf32>, vector<128x128xf32>, vector<8x128xf32> -> vector<8x128xf32>
      %62 = vector.extract_strided_slice %61 {offsets = [0, 0], sizes = [1, 128], strides = [1, 1]} : vector<8x128xf32> to vector<1x128xf32>
      %63 = vector.broadcast %55 : vector<128x1xf32> to vector<128x128xf32>
      %64 = vector.broadcast %62 : vector<1x128xf32> to vector<128x128xf32>
      %65 = arith.addf %63, %64 : vector<128x128xf32>
      %cst_28 = arith.constant 2.000000e-01 : f32
      %66 = vector.broadcast %cst_28 : f32 to vector<128x128xf32>
      %67 = arith.mulf %66, %65 : vector<128x128xf32>
      %68 = arith.maximumf %65, %67 : vector<128x128xf32>
      %69 = arith.addf %68, %17 : vector<128x128xf32>
      %cst_29 = arith.constant dense<0xFF800000> : vector<128xf32>
      %70 = vector.multi_reduction <maximumf>, %69, %cst_29 [1] : vector<128x128xf32> to vector<128xf32>
      %71 = vector.shape_cast %70 : vector<128xf32> to vector<128x1xf32>
      %72 = vector.broadcast %71 : vector<128x1xf32> to vector<128x128xf32>
      %73 = arith.subf %69, %72 : vector<128x128xf32>
      %74 = math.exp %73 : vector<128x128xf32>
      %cst_30 = arith.constant dense<0.000000e+00> : vector<128xf32>
      %75 = vector.multi_reduction <add>, %74, %cst_30 [1] : vector<128x128xf32> to vector<128xf32>
      %76 = vector.shape_cast %75 : vector<128xf32> to vector<128x1xf32>
      %77 = arith.truncf %74 : vector<128x128xf32> to vector<128x128xbf16>
      %78 = arith.truncf %54 : vector<128x128xf32> to vector<128x128xbf16>
      %cst_31 = arith.constant dense<0.000000e+00> : vector<128x128xf32>
      %79 = tpu.matmul %77, %78, %cst_31 {dimension_numbers = #tpu.dot_dimension_numbers<[1], [0], [0], [1], [0, 0, 1, 1], [], []>} : vector<128x128xbf16>, vector<128x128xbf16>, vector<128x128xf32> -> vector<128x128xf32>
      %80 = tpu.reciprocal %76 {approx = true} : vector<128x1xf32> -> vector<128x1xf32>
      %81 = vector.broadcast %80 : vector<128x1xf32> to vector<128x128xf32>
      %82 = arith.mulf %79, %81 : vector<128x128xf32>
      %c0_32 = arith.constant 0 : index
      %c0_33 = arith.constant 0 : index
      %83 = vector.load %arg6[%c0_32, %c0_33] : memref<1x128xf32, #tpu.memory_space<vmem>>, vector<1x128xf32>
      %84 = vector.broadcast %83 : vector<1x128xf32> to vector<128x128xf32>
      %85 = arith.addf %82, %84 : vector<128x128xf32>
      %c0_34 = arith.constant 0 : index
      %c0_35 = arith.constant 0 : index
      %86 = vector.load %arg7[%c0_34, %c0_35] : memref<128x128xf32, #tpu.memory_space<vmem>>, vector<128x128xf32>
      tpu.vector_store %arg7[%c0_34, %c0_35], %85 {strides = array<i32>} : memref<128x128xf32, #tpu.memory_space<vmem>>, vector<128x128xf32>,
    } else {
    }
    return
  }
  func.func @transform_0(%arg0: i32) -> (i32, i32) {
    %c0_i32 = arith.constant 0 : i32
    %c0_i32_0 = arith.constant 0 : i32
    %c0_i32_1 = arith.constant 0 : i32
    return %c0_i32, %c0_i32_0 : i32, i32
  }
  func.func @transform_1(%arg0: i32) -> (i32, i32) {
    %c0_i32 = arith.constant 0 : i32
    %c0_i32_0 = arith.constant 0 : i32
    return %c0_i32, %arg0 : i32, i32
  }
  func.func @transform_2(%arg0: i32) -> (i32, i32) {
    %c0_i32 = arith.constant 0 : i32
    %c0_i32_0 = arith.constant 0 : i32
    return %arg0, %c0_i32 : i32, i32
  }
  func.func @transform_3(%arg0: i32) -> (i32, i32) {
    %c0_i32 = arith.constant 0 : i32
    %c0_i32_0 = arith.constant 0 : i32
    %c0_i32_1 = arith.constant 0 : i32
    return %c0_i32, %c0_i32_0 : i32, i32
  }
  func.func @transform_4(%arg0: i32) -> (i32, i32) {
    %c0_i32 = arith.constant 0 : i32
    %c0_i32_0 = arith.constant 0 : i32
    %c0_i32_1 = arith.constant 0 : i32
    return %c0_i32, %c0_i32_0 : i32, i32
  }
  func.func @transform_5(%arg0: i32) -> (i32, i32) {
    %c0_i32 = arith.constant 0 : i32
    %c0_i32_0 = arith.constant 0 : i32
    %c0_i32_1 = arith.constant 0 : i32
    return %c0_i32, %c0_i32_0 : i32, i32
  }
  func.func @transform_6(%arg0: i32) -> (i32, i32) {
    %c0_i32 = arith.constant 0 : i32
    %c0_i32_0 = arith.constant 0 : i32
    %c0_i32_1 = arith.constant 0 : i32
    return %c0_i32, %c0_i32_0 : i32, i32
  }
}

</mosaic_0001>

<llo_original>
// kernel: gat_forward.1
$region0: #{gat_forward.1}
  #allocation0 [shape = 'u32[]', space=smem, size = 0x4, offset = 0x4, fixed_abs, tag = 'smem constant byte address 0x4 - core index']
  #allocation1 [shape = 'u32[144,128]{1,0:T(1,128)}', space=vmem, size = 0x12000, scoped, tag = 'internal scratch']
  #allocation2 [shape = 'f32[128,128]{1,0:T(8,128)}', space=vmem, size = 0x10000, scoped, tag = 'scratch operand']
  %s0 = inlined_call_operand.hbm [shape: s8[128,128], index: 0, kind: input, shape index: {}]
  %s1 = inlined_call_operand.vmem [shape: bf16[128,128], index: 1, kind: input, shape index: {}]
  %s2 = inlined_call_operand.vmem [shape: bf16[128,128], index: 2, kind: input, shape index: {}]
  %s3 = inlined_call_operand.vmem [shape: f32[1,128], index: 3, kind: input, shape index: {}]
  %s4 = inlined_call_operand.vmem [shape: bf16[128,128], index: 4, kind: input, shape index: {}]
  %s5 = inlined_call_operand.vmem [shape: f32[1,128], index: 5, kind: input, shape index: {}]
  %s6 = inlined_call_operand.vmem [shape: f32[128,128], index: 6, kind: output, shape index: {}]
  %s7 = sld [smem:[#allocation0]]
  $region46: #{gat_forward.1} parent=0
    _
  %s9 = ssub.s32 1, %s7
  %s10 = scalar_select 0, %s9, %s7
  $region1: #{gat_forward.1} parent=0
    #allocation3 [shape = 'u8[16384]{0}', space=vmem, size = 0x4000, scoped, tag = 'input window, operand 0, single buffered']
    #allocation4 [shape = 's32[1]{0}', space=sflag, size = 0x4, scoped, tag = 'scoped memory for gat_forward.1']
    %11 = vsyncpa [#allocation4], 0
    // Predicated region
    $region2: #{gat_forward.1} parent=1 // pred_check
      _
    $region3: #{gat_forward.1} parent=1 // pred_check_branch
      %13 = sbr.rel (0) target = $region5
    $region4: #{gat_forward.1} parent=1 // pred_region
      %s15 = ssub.s32 512, 512
      %16 = vsyncadd [#allocation4], %s15
      %s17 = sshll.u32 [#allocation3], 4
      %s18 = int_to_ptr.vmem [resolvable:$true] %s17
      %23 = dma.hbm_to_vmem [thread:$0]  %s0, 512, %s18, [#allocation4], 128, 128, 8
    $region5: #{gat_forward.1} parent=1 // pred_fallthru
      _
    // Predicated region
    $region6: #{gat_forward.1} parent=1 // pred_check
      _
    $region7: #{gat_forward.1} parent=1 // pred_check_branch
      %25 = sbr.rel (0) target = $region9
    $region8: #{gat_forward.1} parent=1 // pred_region
      _
    $region9: #{gat_forward.1} parent=1 // pred_fallthru
      _
    // Predicated region
    $region10: #{gat_forward.1} parent=1 // pred_check
      _
    $region11: #{gat_forward.1} parent=1 // pred_check_branch
      %27 = sbr.rel (0) target = $region13
    $region12: #{gat_forward.1} parent=1 // pred_region
      _
    $region13: #{gat_forward.1} parent=1 // pred_fallthru
      _
    // Predicated region
    $region14: #{gat_forward.1} parent=1 // pred_check
      _
    $region15: #{gat_forward.1} parent=1 // pred_check_branch
      %29 = sbr.rel (0) target = $region17
    $region16: #{gat_forward.1} parent=1 // pred_region
      _
    $region17: #{gat_forward.1} parent=1 // pred_fallthru
      _
    // Predicated region
    $region18: #{gat_forward.1} parent=1 // pred_check
      _
    $region19: #{gat_forward.1} parent=1 // pred_check_branch
      %31 = sbr.rel (0) target = $region21
    $region20: #{gat_forward.1} parent=1 // pred_region
      _
    $region21: #{gat_forward.1} parent=1 // pred_fallthru
      _
    // Predicated region
    $region22: #{gat_forward.1} parent=1 // pred_check
      _
    $region23: #{gat_forward.1} parent=1 // pred_check_branch
      %33 = sbr.rel (0) target = $region25
    $region24: #{gat_forward.1} parent=1 // pred_region
      _
    $region25: #{gat_forward.1} parent=1 // pred_fallthru
      _
    // Predicated region
    $region26: #{gat_forward.1} parent=1 // pred_check
      _
    $region27: #{gat_forward.1} parent=1 // pred_check_branch
      %35 = sbr.rel (0) target = $region29
    $region28: #{gat_forward.1} parent=1 // pred_region
      %36 = dma.done [#allocation4], 512
    $region29: #{gat_forward.1} parent=1 // pred_fallthru
      _
    %p38 = scmp.eq.s32.totalorder 0, 0
    // Predicated region
    $region30: #{gat_forward.1} parent=1 // pred_check
      %p39 = pneg %p38
    $region31: #{gat_forward.1} parent=1 // pred_check_branch
      %41 = sbr.rel (%p39) target = $region33
    $region32: #{gat_forward.1} parent=1 // pred_region
      %42 = vst [vmem:[#allocation2] sm:$0xff] 0.0
      %43 = vst [vmem:[#allocation2 + $0x8] sm:$0xff] 0.0
      %44 = vst [vmem:[#allocation2 + $0x10] sm:$0xff] 0.0
      %45 = vst [vmem:[#allocation2 + $0x18] sm:$0xff] 0.0
      %46 = vst [vmem:[#allocation2 + $0x20] sm:$0xff] 0.0
      %47 = vst [vmem:[#allocation2 + $0x28] sm:$0xff] 0.0
      %48 = vst [vmem:[#allocation2 + $0x30] sm:$0xff] 0.0
      %49 = vst [vmem:[#allocation2 + $0x38] sm:$0xff] 0.0
      %50 = vst [vmem:[#allocation2 + $0x40] sm:$0xff] 0.0
      %51 = vst [vmem:[#allocation2 + $0x48] sm:$0xff] 0.0
      %52 = vst [vmem:[#allocation2 + $0x50] sm:$0xff] 0.0
      %53 = vst [vmem:[#allocation2 + $0x58] sm:$0xff] 0.0
      %54 = vst [vmem:[#allocation2 + $0x60] sm:$0xff] 0.0
      %55 = vst [vmem:[#allocation2 + $0x68] sm:$0xff] 0.0
      %56 = vst [vmem:[#allocation2 + $0x70] sm:$0xff] 0.0
      %57 = vst [vmem:[#allocation2 + $0x78] sm:$0xff] 0.0
    $region33: #{gat_forward.1} parent=1 // pred_fallthru
      _
    %v58 = vld [vmem:[#allocation2] sm:$0xff]
    %v59 = vld [vmem:[#allocation2 + $0x8] sm:$0xff]
    %v60 = vld [vmem:[#allocation2 + $0x10] sm:$0xff]
    %v61 = vld [vmem:[#allocation2 + $0x18] sm:$0xff]
    %v62 = vld [vmem:[#allocation2 + $0x20] sm:$0xff]
    %v63 = vld [vmem:[#allocation2 + $0x28] sm:$0xff]
    %v64 = vld [vmem:[#allocation2 + $0x30] sm:$0xff]
    %v65 = vld [vmem:[#allocation2 + $0x38] sm:$0xff]
    %v66 = vld [vmem:[#allocation2 + $0x40] sm:$0xff]
    %v67 = vld [vmem:[#allocation2 + $0x48] sm:$0xff]
    %v68 = vld [vmem:[#allocation2 + $0x50] sm:$0xff]
    %v69 = vld [vmem:[#allocation2 + $0x58] sm:$0xff]
    %v70 = vld [vmem:[#allocation2 + $0x60] sm:$0xff]
    %v71 = vld [vmem:[#allocation2 + $0x68] sm:$0xff]
    %v72 = vld [vmem:[#allocation2 + $0x70] sm:$0xff]
    %v73 = vld [vmem:[#allocation2 + $0x78] sm:$0xff]
    %v74 = vld [vmem:[%s1] sm:$0xf]
    %v75 = vld [vmem:[%s1 + $0x4] sm:$0xf]
    %v76 = vld [vmem:[%s1 + $0x8] sm:$0xf]
    %v77 = vld [vmem:[%s1 + $0xc] sm:$0xf]
    %v78 = vld [vmem:[%s1 + $0x10] sm:$0xf]
    %v79 = vld [vmem:[%s1 + $0x14] sm:$0xf]
    %v80 = vld [vmem:[%s1 + $0x18] sm:$0xf]
    %v81 = vld [vmem:[%s1 + $0x1c] sm:$0xf]
    %v82 = vld [vmem:[%s1 + $0x20] sm:$0xf]
    %v83 = vld [vmem:[%s1 + $0x24] sm:$0xf]
    %v84 = vld [vmem:[%s1 + $0x28] sm:$0xf]
    %v85 = vld [vmem:[%s1 + $0x2c] sm:$0xf]
    %v86 = vld [vmem:[%s1 + $0x30] sm:$0xf]
    %v87 = vld [vmem:[%s1 + $0x34] sm:$0xf]
    %v88 = vld [vmem:[%s1 + $0x38] sm:$0xf]
    %v89 = vld [vmem:[%s1 + $0x3c] sm:$0xf]
    %v90 = vld [vmem:[%s2] sm:$0xf]
    %v91 = vld [vmem:[%s2 + $0x4] sm:$0xf]
    %v92 = vld [vmem:[%s2 + $0x8] sm:$0xf]
    %v93 = vld [vmem:[%s2 + $0xc] sm:$0xf]
    %v94 = vld [vmem:[%s2 + $0x10] sm:$0xf]
    %v95 = vld [vmem:[%s2 + $0x14] sm:$0xf]
    %v96 = vld [vmem:[%s2 + $0x18] sm:$0xf]
    %v97 = vld [vmem:[%s2 + $0x1c] sm:$0xf]
    %v98 = vld [vmem:[%s2 + $0x20] sm:$0xf]
    %v99 = vld [vmem:[%s2 + $0x24] sm:$0xf]
    %v100 = vld [vmem:[%s2 + $0x28] sm:$0xf]
    %v101 = vld [vmem:[%s2 + $0x2c] sm:$0xf]
    %v102 = vld [vmem:[%s2 + $0x30] sm:$0xf]
    %v103 = vld [vmem:[%s2 + $0x34] sm:$0xf]
    %v104 = vld [vmem:[%s2 + $0x38] sm:$0xf]
    %v105 = vld [vmem:[%s2 + $0x3c] sm:$0xf]
    %v122 = vunpack.c.l.b16 %v74
    %v123 = vunpack.c.l.b16 %v75
    %v124 = vunpack.c.l.b16 %v76
    %v125 = vunpack.c.l.b16 %v77
    %v126 = vunpack.c.l.b16 %v78
    %v127 = vunpack.c.l.b16 %v79
    %v128 = vunpack.c.l.b16 %v80
    %v129 = vunpack.c.l.b16 %v81
    %v130 = vunpack.c.l.b16 %v82
    %v131 = vunpack.c.l.b16 %v83
    %v132 = vunpack.c.l.b16 %v84
    %v133 = vunpack.c.l.b16 %v85
    %v134 = vunpack.c.l.b16 %v86
    %v135 = vunpack.c.l.b16 %v87
    %v136 = vunpack.c.l.b16 %v88
    %v137 = vunpack.c.l.b16 %v89
    %v138 = vpack.c.b16 %v123, %v122
    %v139 = vpack.c.b16 %v125, %v124
    %v140 = vpack.c.b16 %v127, %v126
    %v141 = vpack.c.b16 %v129, %v128
    %v142 = vpack.c.b16 %v131, %v130
    %v143 = vpack.c.b16 %v133, %v132
    %v144 = vpack.c.b16 %v135, %v134
    %v145 = vpack.c.b16 %v137, %v136
    %v170 = vunpack.c.l.b16 %v90
    %v171 = vunpack.c.l.b16 %v91
    %v172 = vunpack.c.l.b16 %v92
    %v173 = vunpack.c.l.b16 %v93
    %v174 = vunpack.c.l.b16 %v94
    %v175 = vunpack.c.l.b16 %v95
    %v176 = vunpack.c.l.b16 %v96
    %v177 = vunpack.c.l.b16 %v97
    %v178 = vunpack.c.l.b16 %v98
    %v179 = vunpack.c.l.b16 %v99
    %v180 = vunpack.c.l.b16 %v100
    %v181 = vunpack.c.l.b16 %v101
    %v182 = vunpack.c.l.b16 %v102
    %v183 = vunpack.c.l.b16 %v103
    %v184 = vunpack.c.l.b16 %v104
    %v185 = vunpack.c.l.b16 %v105
    %v186 = vpack.c.b16 %v171, %v170
    %v187 = vpack.c.b16 %v173, %v172
    %v188 = vpack.c.b16 %v175, %v174
    %v189 = vpack.c.b16 %v177, %v176
    %v190 = vpack.c.b16 %v179, %v178
    %v191 = vpack.c.b16 %v181, %v180
    %v192 = vpack.c.b16 %v183, %v182
    %v193 = vpack.c.b16 %v185, %v184
    %202 = vmatprep.subr.bf16.mxu0 0
    %203 = vmatpush1.bf16.msra.mxu0 %v186
    %204 = vmatprep.subr.bf16.mxu0 0
    %205 = vmatpush1.bf16.msra.mxu0 %v187
    %206 = vmatprep.subr.bf16.mxu0 0
    %207 = vmatpush1.bf16.msra.mxu0 %v188
    %208 = vmatprep.subr.bf16.mxu0 0
    %209 = vmatpush1.bf16.msra.mxu0 %v189
    %210 = vmatprep.subr.bf16.mxu0 0
    %211 = vmatpush1.bf16.msra.mxu0 %v190
    %212 = vmatprep.subr.bf16.mxu0 0
    %213 = vmatpush1.bf16.msra.mxu0 %v191
    %214 = vmatprep.subr.bf16.mxu0 0
    %215 = vmatpush1.bf16.msra.mxu0 %v192
    %216 = vmatprep.subr.bf16.mxu0 0
    %217 = vmatpush1.bf16.msra.mxu0 %v193
    %218 = vmatprep.subr.bf16.mxu0 0
    %219 = vmatpush1.bf16.msra.mxu0 0
    %220 = vmatprep.subr.bf16.mxu0 0
    %221 = vmatpush1.bf16.msra.mxu0 0
    %222 = vmatprep.subr.bf16.mxu0 0
    %223 = vmatpush1.bf16.msra.mxu0 0
    %224 = vmatprep.subr.bf16.mxu0 0
    %225 = vmatpush1.bf16.msra.mxu0 0
    %226 = vmatprep.subr.bf16.mxu0 0
    %227 = vmatpush1.bf16.msra.mxu0 0
    %228 = vmatprep.subr.bf16.mxu0 0
    %229 = vmatpush1.bf16.msra.mxu0 0
    %230 = vmatprep.subr.bf16.mxu0 0
    %231 = vmatpush1.bf16.msra.mxu0 0
    %232 = vmatprep.subr.bf16.mxu0 0
    %233 = vmatpush1.bf16.msra.mxu0 0
    %234 = vmatprep.mubr.bf16.mxu0 0
    %235 = vmatmul.mubr.bf16.gmra.mrb[0].mxu0 %v138
    %v236 = vpop.f32.mrb[0].mxu0
    %v237 = vadd.f32 0.0, %v236
    %v238 = vpop.f32.mrb[0].mxu0
    %v239 = vpop.f32.mrb[0].mxu0
    %v240 = vadd.f32 0.0, %v239
    %v241 = vpop.f32.mrb[0].mxu0
    %242 = vmatprep.mubr.bf16.mxu0 0
    %243 = vmatmul.mubr.bf16.gmra.mrb[0].mxu0 %v139
    %v244 = vpop.f32.mrb[0].mxu0
    %v245 = vadd.f32 0.0, %v244
    %v246 = vpop.f32.mrb[0].mxu0
    %v247 = vpop.f32.mrb[0].mxu0
    %v248 = vadd.f32 0.0, %v247
    %v249 = vpop.f32.mrb[0].mxu0
    %250 = vmatprep.mubr.bf16.mxu0 0
    %251 = vmatmul.mubr.bf16.gmra.mrb[0].mxu0 %v140
    %v252 = vpop.f32.mrb[0].mxu0
    %v253 = vadd.f32 0.0, %v252
    %v254 = vpop.f32.mrb[0].mxu0
    %v255 = vpop.f32.mrb[0].mxu0
    %v256 = vadd.f32 0.0, %v255
    %v257 = vpop.f32.mrb[0].mxu0
    %258 = vmatprep.mubr.bf16.mxu0 0
    %259 = vmatmul.mubr.bf16.gmra.mrb[0].mxu0 %v141
    %v260 = vpop.f32.mrb[0].mxu0
    %v261 = vadd.f32 0.0, %v260
    %v262 = vpop.f32.mrb[0].mxu0
    %v263 = vpop.f32.mrb[0].mxu0
    %v264 = vadd.f32 0.0, %v263
    %v265 = vpop.f32.mrb[0].mxu0
    %266 = vmatprep.mubr.bf16.mxu0 0
    %267 = vmatmul.mubr.bf16.gmra.mrb[0].mxu0 %v142
    %v268 = vpop.f32.mrb[0].mxu0
    %v269 = vadd.f32 0.0, %v268
    %v270 = vpop.f32.mrb[0].mxu0
    %v271 = vpop.f32.mrb[0].mxu0
    %v272 = vadd.f32 0.0, %v271
    %v273 = vpop.f32.mrb[0].mxu0
    %274 = vmatprep.mubr.bf16.mxu0 0
    %275 = vmatmul.mubr.bf16.gmra.mrb[0].mxu0 %v143
    %v276 = vpop.f32.mrb[0].mxu0
    %v277 = vadd.f32 0.0, %v276
    %v278 = vpop.f32.mrb[0].mxu0
    %v279 = vpop.f32.mrb[0].mxu0
    %v280 = vadd.f32 0.0, %v279
    %v281 = vpop.f32.mrb[0].mxu0
    %282 = vmatprep.mubr.bf16.mxu0 0
    %283 = vmatmul.mubr.bf16.gmra.mrb[0].mxu0 %v144
    %v284 = vpop.f32.mrb[0].mxu0
    %v285 = vadd.f32 0.0, %v284
    %v286 = vpop.f32.mrb[0].mxu0
    %v287 = vpop.f32.mrb[0].mxu0
    %v288 = vadd.f32 0.0, %v287
    %v289 = vpop.f32.mrb[0].mxu0
    %290 = vmatprep.mubr.bf16.mxu0 0
    %291 = vmatmul.mubr.bf16.gmra.mrb[0].mxu0 %v145
    %v292 = vpop.f32.mrb[0].mxu0
    %v293 = vadd.f32 0.0, %v292
    %v294 = vpop.f32.mrb[0].mxu0
    %v295 = vpop.f32.mrb[0].mxu0
    %v296 = vadd.f32 0.0, %v295
    %v297 = vpop.f32.mrb[0].mxu0
    %298 = vdwg.mxu0
    %v299 = vadd.f32 %v58, %v237
    %v300 = vadd.f32 %v59, %v240
    %v301 = vadd.f32 %v60, %v245
    %v302 = vadd.f32 %v61, %v248
    %v303 = vadd.f32 %v62, %v253
    %v304 = vadd.f32 %v63, %v256
    %v305 = vadd.f32 %v64, %v261
    %v306 = vadd.f32 %v65, %v264
    %v307 = vadd.f32 %v66, %v269
    %v308 = vadd.f32 %v67, %v272
    %v309 = vadd.f32 %v68, %v277
    %v310 = vadd.f32 %v69, %v280
    %v311 = vadd.f32 %v70, %v285
    %v312 = vadd.f32 %v71, %v288
    %v313 = vadd.f32 %v72, %v293
    %v314 = vadd.f32 %v73, %v296
    %315 = vst [vmem:[#allocation2] sm:$0xff] %v299
    %316 = vst [vmem:[#allocation2 + $0x8] sm:$0xff] %v300
    %317 = vst [vmem:[#allocation2 + $0x10] sm:$0xff] %v301
    %318 = vst [vmem:[#allocation2 + $0x18] sm:$0xff] %v302
    %319 = vst [vmem:[#allocation2 + $0x20] sm:$0xff] %v303
    %320 = vst [vmem:[#allocation2 + $0x28] sm:$0xff] %v304
    %321 = vst [vmem:[#allocation2 + $0x30] sm:$0xff] %v305
    %322 = vst [vmem:[#allocation2 + $0x38] sm:$0xff] %v306
    %323 = vst [vmem:[#allocation2 + $0x40] sm:$0xff] %v307
    %324 = vst [vmem:[#allocation2 + $0x48] sm:$0xff] %v308
    %325 = vst [vmem:[#allocation2 + $0x50] sm:$0xff] %v309
    %326 = vst [vmem:[#allocation2 + $0x58] sm:$0xff] %v310
    %327 = vst [vmem:[#allocation2 + $0x60] sm:$0xff] %v311
    %328 = vst [vmem:[#allocation2 + $0x68] sm:$0xff] %v312
    %329 = vst [vmem:[#allocation2 + $0x70] sm:$0xff] %v313
    %330 = vst [vmem:[#allocation2 + $0x78] sm:$0xff] %v314
    // Predicated region
    $region34: #{gat_forward.1} parent=1 // pred_check
      %p331 = pneg %p38
    $region35: #{gat_forward.1} parent=1 // pred_check_branch
      %333 = sbr.rel (%p331) target = $region37
    $region36: #{gat_forward.1} parent=1 // pred_region
      %v334 = vld [vmem:[#allocation3] sm:$0xff]
      %v335 = vld [vmem:[#allocation3 + $0x8] sm:$0xff]
      %v336 = vld [vmem:[#allocation3 + $0x10] sm:$0xff]
      %v337 = vld [vmem:[#allocation3 + $0x18] sm:$0xff]
      %v338 = vunpack.c.0.s8 %v334
      %v339 = vunpack.c.1.s8 %v334
      %v340 = vunpack.c.2.s8 %v334
      %v341 = vunpack.c.3.s8 %v334
      %v342 = vunpack.c.0.s8 %v335
      %v343 = vunpack.c.1.s8 %v335
      %v344 = vunpack.c.2.s8 %v335
      %v345 = vunpack.c.3.s8 %v335
      %v346 = vunpack.c.0.s8 %v336
      %v347 = vunpack.c.1.s8 %v336
      %v348 = vunpack.c.2.s8 %v336
      %v349 = vunpack.c.3.s8 %v336
      %v350 = vunpack.c.0.s8 %v337
      %v351 = vunpack.c.1.s8 %v337
      %v352 = vunpack.c.2.s8 %v337
      %v353 = vunpack.c.3.s8 %v337
      %v354 = vcvt.s32.f32 %v338
      %v355 = vcvt.s32.f32 %v339
      %v356 = vcvt.s32.f32 %v340
      %v357 = vcvt.s32.f32 %v341
      %v358 = vcvt.s32.f32 %v342
      %v359 = vcvt.s32.f32 %v343
      %v360 = vcvt.s32.f32 %v344
      %v361 = vcvt.s32.f32 %v345
      %v362 = vcvt.s32.f32 %v346
      %v363 = vcvt.s32.f32 %v347
      %v364 = vcvt.s32.f32 %v348
      %v365 = vcvt.s32.f32 %v349
      %v366 = vcvt.s32.f32 %v350
      %v367 = vcvt.s32.f32 %v351
      %v368 = vcvt.s32.f32 %v352
      %v369 = vcvt.s32.f32 %v353
      %v370 = vsub.f32 %v354, 1.0
      %v371 = vsub.f32 %v355, 1.0
      %v372 = vsub.f32 %v356, 1.0
      %v373 = vsub.f32 %v357, 1.0
      %v374 = vsub.f32 %v358, 1.0
      %v375 = vsub.f32 %v359, 1.0
      %v376 = vsub.f32 %v360, 1.0
      %v377 = vsub.f32 %v361, 1.0
      %v378 = vsub.f32 %v362, 1.0
      %v379 = vsub.f32 %v363, 1.0
      %v380 = vsub.f32 %v364, 1.0
      %v381 = vsub.f32 %v365, 1.0
      %v382 = vsub.f32 %v366, 1.0
      %v383 = vsub.f32 %v367, 1.0
      %v384 = vsub.f32 %v368, 1.0
      %v385 = vsub.f32 %v369, 1.0
      %v386 = vmul.f32 %v370, 1e+09
      %v387 = vmul.f32 %v371, 1e+09
      %v388 = vmul.f32 %v372, 1e+09
      %v389 = vmul.f32 %v373, 1e+09
      %v390 = vmul.f32 %v374, 1e+09
      %v391 = vmul.f32 %v375, 1e+09
      %v392 = vmul.f32 %v376, 1e+09
      %v393 = vmul.f32 %v377, 1e+09
      %v394 = vmul.f32 %v378, 1e+09
      %v395 = vmul.f32 %v379, 1e+09
      %v396 = vmul.f32 %v380, 1e+09
      %v397 = vmul.f32 %v381, 1e+09
      %v398 = vmul.f32 %v382, 1e+09
      %v399 = vmul.f32 %v383, 1e+09
      %v400 = vmul.f32 %v384, 1e+09
      %v401 = vmul.f32 %v385, 1e+09
      %v402 = vld [vmem:[#allocation2] sm:$0xff]
      %v403 = vld [vmem:[#allocation2 + $0x8] sm:$0xff]
      %v404 = vld [vmem:[#allocation2 + $0x10] sm:$0xff]
      %v405 = vld [vmem:[#allocation2 + $0x18] sm:$0xff]
      %v406 = vld [vmem:[#allocation2 + $0x20] sm:$0xff]
      %v407 = vld [vmem:[#allocation2 + $0x28] sm:$0xff]
      %v408 = vld [vmem:[#allocation2 + $0x30] sm:$0xff]
      %v409 = vld [vmem:[#allocation2 + $0x38] sm:$0xff]
      %v410 = vld [vmem:[#allocation2 + $0x40] sm:$0xff]
      %v411 = vld [vmem:[#allocation2 + $0x48] sm:$0xff]
      %v412 = vld [vmem:[#allocation2 + $0x50] sm:$0xff]
      %v413 = vld [vmem:[#allocation2 + $0x58] sm:$0xff]
      %v414 = vld [vmem:[#allocation2 + $0x60] sm:$0xff]
      %v415 = vld [vmem:[#allocation2 + $0x68] sm:$0xff]
      %v416 = vld [vmem:[#allocation2 + $0x70] sm:$0xff]
      %v417 = vld [vmem:[#allocation2 + $0x78] sm:$0xff]
      %v418 = vlaneseq
      %v419 = vand.u32 %v418, 127
      %vm420 = vcmp.eq.s32.totalorder %v419, 16
      %v421 = vsel %vm420, 1, 0
      %v422 = vcvt.s32.f32 %v421
      %423 = vmatprep.subr.mxu0 0.0
      %424 = vmatpush1.xpose.msra.mxu0 %v402
      %425 = vmatprep.subr.mxu0 0.0
      %426 = vmatpush1.xpose.msra.mxu0 %v403
      %427 = vmatprep.subr.mxu0 0.0
      %428 = vmatpush1.xpose.msra.mxu0 %v404
      %429 = vmatprep.subr.mxu0 0.0
      %430 = vmatpush1.xpose.msra.mxu0 %v405
      %431 = vmatprep.subr.mxu0 0.0
      %432 = vmatpush1.xpose.msra.mxu0 %v406
      %433 = vmatprep.subr.mxu0 0.0
      %434 = vmatpush1.xpose.msra.mxu0 %v407
      %435 = vmatprep.subr.mxu0 0.0
      %436 = vmatpush1.xpose.msra.mxu0 %v408
      %437 = vmatprep.subr.mxu0 0.0
      %438 = vmatpush1.xpose.msra.mxu0 %v409
      %439 = vmatprep.subr.mxu0 0.0
      %440 = vmatpush1.xpose.msra.mxu0 %v410
      %441 = vmatprep.subr.mxu0 0.0
      %442 = vmatpush1.xpose.msra.mxu0 %v411
      %443 = vmatprep.subr.mxu0 0.0
      %444 = vmatpush1.xpose.msra.mxu0 %v412
      %445 = vmatprep.subr.mxu0 0.0
      %446 = vmatpush1.xpose.msra.mxu0 %v413
      %447 = vmatprep.subr.mxu0 0.0
      %448 = vmatpush1.xpose.msra.mxu0 %v414
      %449 = vmatprep.subr.mxu0 0.0
      %450 = vmatpush1.xpose.msra.mxu0 %v415
      %451 = vmatprep.subr.mxu0 0.0
      %452 = vmatpush1.xpose.msra.mxu0 %v416
      %453 = vmatprep.subr.mxu0 0.0
      %454 = vmatpush1.xpose.msra.mxu0 %v417
      %455 = vmatprep.subr.mxu0 0.0
      %456 = vmatpush1.xpose.msra.mxu0 0.0
      %457 = vmatprep.subr.mxu0 0.0
      %458 = vmatpush1.xpose.msra.mxu0 0.0
      %459 = vmatprep.subr.mxu0 0.0
      %460 = vmatpush1.xpose.msra.mxu0 0.0
      %461 = vmatprep.subr.mxu0 0.0
      %462 = vmatpush1.xpose.msra.mxu0 0.0
      %463 = vmatprep.subr.mxu0 0.0
      %464 = vmatpush1.xpose.msra.mxu0 0.0
      %465 = vmatprep.subr.mxu0 0.0
      %466 = vmatpush1.xpose.msra.mxu0 0.0
      %467 = vmatprep.subr.mxu0 0.0
      %468 = vmatpush1.xpose.msra.mxu0 0.0
      %469 = vmatprep.subr.mxu0 0.0
      %470 = vmatpush1.xpose.msra.mxu0 0.0
      %471 = vmatprep.subr.mxu0 0.0
      %472 = vmatpush1.xpose.msra.mxu0 0.0
      %473 = vmatprep.subr.mxu0 0.0
      %474 = vmatpush1.xpose.msra.mxu0 0.0
      %475 = vmatprep.subr.mxu0 0.0
      %476 = vmatpush1.xpose.msra.mxu0 0.0
      %477 = vmatprep.subr.mxu0 0.0
      %478 = vmatpush1.xpose.msra.mxu0 0.0
      %479 = vmatprep.subr.mxu0 0.0
      %480 = vmatpush1.xpose.msra.mxu0 0.0
      %481 = vmatprep.subr.mxu0 0.0
      %482 = vmatpush1.xpose.msra.mxu0 0.0
      %483 = vmatprep.subr.mxu0 0.0
      %484 = vmatpush1.xpose.msra.mxu0 0.0
      %485 = vmatprep.subr.mxu0 0.0
      %486 = vmatpush1.xpose.msra.mxu0 0.0
      %487 = vmatprep.mubr.f32.mxu0 0.0
      %488 = vmatmul.mubr.f32.gmra.mrb[0].mxu0 %v422
      %v489 = vpop.f32.mrb[0].mxu0
      %v490 = vadd.f32 0.0, %v489
      %v491 = vpop.f32.mrb[0].mxu0
      %492 = vdwg.mxu0
      %494 = vset.pattern.permute.xlu0 17
      %495 = vperm.xlu0 %494, %v402
      %v496 = vpop.permute.xlu0 %495
      %499 = vset.pattern.permute.xlu0 17
      %500 = vperm.xlu0 %499, %v403
      %v501 = vpop.permute.xlu0 %500
      %504 = vset.pattern.permute.xlu0 17
      %505 = vperm.xlu0 %504, %v404
      %v506 = vpop.permute.xlu0 %505
      %509 = vset.pattern.permute.xlu0 17
      %510 = vperm.xlu0 %509, %v405
      %v511 = vpop.permute.xlu0 %510
      %514 = vset.pattern.permute.xlu0 17
      %515 = vperm.xlu0 %514, %v406
      %v516 = vpop.permute.xlu0 %515
      %519 = vset.pattern.permute.xlu0 17
      %520 = vperm.xlu0 %519, %v407
      %v521 = vpop.permute.xlu0 %520
      %524 = vset.pattern.permute.xlu0 17
      %525 = vperm.xlu0 %524, %v408
      %v526 = vpop.permute.xlu0 %525
      %529 = vset.pattern.permute.xlu0 17
      %530 = vperm.xlu0 %529, %v409
      %v531 = vpop.permute.xlu0 %530
      %534 = vset.pattern.permute.xlu0 17
      %535 = vperm.xlu0 %534, %v410
      %v536 = vpop.permute.xlu0 %535
      %539 = vset.pattern.permute.xlu0 17
      %540 = vperm.xlu0 %539, %v411
      %v541 = vpop.permute.xlu0 %540
      %544 = vset.pattern.permute.xlu0 17
      %545 = vperm.xlu0 %544, %v412
      %v546 = vpop.permute.xlu0 %545
      %549 = vset.pattern.permute.xlu0 17
      %550 = vperm.xlu0 %549, %v413
      %v551 = vpop.permute.xlu0 %550
      %554 = vset.pattern.permute.xlu0 17
      %555 = vperm.xlu0 %554, %v414
      %v556 = vpop.permute.xlu0 %555
      %559 = vset.pattern.permute.xlu0 17
      %560 = vperm.xlu0 %559, %v415
      %v561 = vpop.permute.xlu0 %560
      %564 = vset.pattern.permute.xlu0 17
      %565 = vperm.xlu0 %564, %v416
      %v566 = vpop.permute.xlu0 %565
      %569 = vset.pattern.permute.xlu0 17
      %570 = vperm.xlu0 %569, %v417
      %v571 = vpop.permute.xlu0 %570
      %v573 = vlaneseq
      %v574 = vshrl.u32 %v573, 7
      %v575 = vsub.s32 0, %v574
      %v576 = vrot.slane %v490, %v575
      %v577 = vadd.f32 %v496, %v576
      %v578 = vadd.f32 %v501, %v576
      %v579 = vadd.f32 %v506, %v576
      %v580 = vadd.f32 %v511, %v576
      %v581 = vadd.f32 %v516, %v576
      %v582 = vadd.f32 %v521, %v576
      %v583 = vadd.f32 %v526, %v576
      %v584 = vadd.f32 %v531, %v576
      %v585 = vadd.f32 %v536, %v576
      %v586 = vadd.f32 %v541, %v576
      %v587 = vadd.f32 %v546, %v576
      %v588 = vadd.f32 %v551, %v576
      %v589 = vadd.f32 %v556, %v576
      %v590 = vadd.f32 %v561, %v576
      %v591 = vadd.f32 %v566, %v576
      %v592 = vadd.f32 %v571, %v576
      %v593 = vmul.f32 %v577, 0.2
      %v594 = vmul.f32 %v578, 0.2
      %v595 = vmul.f32 %v579, 0.2
      %v596 = vmul.f32 %v580, 0.2
      %v597 = vmul.f32 %v581, 0.2
      %v598 = vmul.f32 %v582, 0.2
      %v599 = vmul.f32 %v583, 0.2
      %v600 = vmul.f32 %v584, 0.2
      %v601 = vmul.f32 %v585, 0.2
      %v602 = vmul.f32 %v586, 0.2
      %v603 = vmul.f32 %v587, 0.2
      %v604 = vmul.f32 %v588, 0.2
      %v605 = vmul.f32 %v589, 0.2
      %v606 = vmul.f32 %v590, 0.2
      %v607 = vmul.f32 %v591, 0.2
      %v608 = vmul.f32 %v592, 0.2
      %v609 = vmax.f32 %v577, %v593
      %v610 = vmax.f32 %v578, %v594
      %v611 = vmax.f32 %v579, %v595
      %v612 = vmax.f32 %v580, %v596
      %v613 = vmax.f32 %v581, %v597
      %v614 = vmax.f32 %v582, %v598
      %v615 = vmax.f32 %v583, %v599
      %v616 = vmax.f32 %v584, %v600
      %v617 = vmax.f32 %v585, %v601
      %v618 = vmax.f32 %v586, %v602
      %v619 = vmax.f32 %v587, %v603
      %v620 = vmax.f32 %v588, %v604
      %v621 = vmax.f32 %v589, %v605
      %v622 = vmax.f32 %v590, %v606
      %v623 = vmax.f32 %v591, %v607
      %v624 = vmax.f32 %v592, %v608
      %v625 = vadd.f32 %v609, %v386
      %v626 = vadd.f32 %v610, %v387
      %v627 = vadd.f32 %v611, %v388
      %v628 = vadd.f32 %v612, %v389
      %v629 = vadd.f32 %v613, %v390
      %v630 = vadd.f32 %v614, %v391
      %v631 = vadd.f32 %v615, %v392
      %v632 = vadd.f32 %v616, %v393
      %v633 = vadd.f32 %v617, %v394
      %v634 = vadd.f32 %v618, %v395
      %v635 = vadd.f32 %v619, %v396
      %v636 = vadd.f32 %v620, %v397
      %v637 = vadd.f32 %v621, %v398
      %v638 = vadd.f32 %v622, %v399
      %v639 = vadd.f32 %v623, %v400
      %v640 = vadd.f32 %v624, %v401
      %641 = vmax.xlane.f32.xlu0 %v625
      %v642 = vpop.xlane.xlu0 %641
      %643 = vmax.xlane.f32.xlu0 %v626
      %v644 = vpop.xlane.xlu0 %643
      %645 = vmax.xlane.f32.xlu0 %v627
      %v646 = vpop.xlane.xlu0 %645
      %647 = vmax.xlane.f32.xlu0 %v628
      %v648 = vpop.xlane.xlu0 %647
      %649 = vmax.xlane.f32.xlu0 %v629
      %v650 = vpop.xlane.xlu0 %649
      %651 = vmax.xlane.f32.xlu0 %v630
      %v652 = vpop.xlane.xlu0 %651
      %653 = vmax.xlane.f32.xlu0 %v631
      %v654 = vpop.xlane.xlu0 %653
      %655 = vmax.xlane.f32.xlu0 %v632
      %v656 = vpop.xlane.xlu0 %655
      %657 = vmax.xlane.f32.xlu0 %v633
      %v658 = vpop.xlane.xlu0 %657
      %659 = vmax.xlane.f32.xlu0 %v634
      %v660 = vpop.xlane.xlu0 %659
      %661 = vmax.xlane.f32.xlu0 %v635
      %v662 = vpop.xlane.xlu0 %661
      %663 = vmax.xlane.f32.xlu0 %v636
      %v664 = vpop.xlane.xlu0 %663
      %665 = vmax.xlane.f32.xlu0 %v637
      %v666 = vpop.xlane.xlu0 %665
      %667 = vmax.xlane.f32.xlu0 %v638
      %v668 = vpop.xlane.xlu0 %667
      %669 = vmax.xlane.f32.xlu0 %v639
      %v670 = vpop.xlane.xlu0 %669
      %671 = vmax.xlane.f32.xlu0 %v640
      %v672 = vpop.xlane.xlu0 %671
      %v673 = vsub.f32 %v625, %v642
      %v674 = vsub.f32 %v626, %v644
      %v675 = vsub.f32 %v627, %v646
      %v676 = vsub.f32 %v628, %v648
      %v677 = vsub.f32 %v629, %v650
      %v678 = vsub.f32 %v630, %v652
      %v679 = vsub.f32 %v631, %v654
      %v680 = vsub.f32 %v632, %v656
      %v681 = vsub.f32 %v633, %v658
      %v682 = vsub.f32 %v634, %v660
      %v683 = vsub.f32 %v635, %v662
      %v684 = vsub.f32 %v636, %v664
      %v685 = vsub.f32 %v637, %v666
      %v686 = vsub.f32 %v638, %v668
      %v687 = vsub.f32 %v639, %v670
      %v688 = vsub.f32 %v640, %v672
      %v689 = vmul.f32 %v673, 1.442695
      %v690 = vpow.pop %v689
      %v691 = vmul.f32 %v674, 1.442695
      %v692 = vpow.pop %v691
      %v693 = vmul.f32 %v675, 1.442695
      %v694 = vpow.pop %v693
      %v695 = vmul.f32 %v676, 1.442695
      %v696 = vpow.pop %v695
      %v697 = vmul.f32 %v677, 1.442695
      %v698 = vpow.pop %v697
      %v699 = vmul.f32 %v678, 1.442695
      %v700 = vpow.pop %v699
      %v701 = vmul.f32 %v679, 1.442695
      %v702 = vpow.pop %v701
      %v703 = vmul.f32 %v680, 1.442695
      %v704 = vpow.pop %v703
      %v705 = vmul.f32 %v681, 1.442695
      %v706 = vpow.pop %v705
      %v707 = vmul.f32 %v682, 1.442695
      %v708 = vpow.pop %v707
      %v709 = vmul.f32 %v683, 1.442695
      %v710 = vpow.pop %v709
      %v711 = vmul.f32 %v684, 1.442695
      %v712 = vpow.pop %v711
      %v713 = vmul.f32 %v685, 1.442695
      %v714 = vpow.pop %v713
      %v715 = vmul.f32 %v686, 1.442695
      %v716 = vpow.pop %v715
      %v717 = vmul.f32 %v687, 1.442695
      %v718 = vpow.pop %v717
      %v719 = vmul.f32 %v688, 1.442695
      %v720 = vpow.pop %v719
      %721 = vadd.xlane.f32.xlu0 %v690
      %v722 = vpop.xlane.xlu0 %721
      %723 = vadd.xlane.f32.xlu0 %v692
      %v724 = vpop.xlane.xlu0 %723
      %725 = vadd.xlane.f32.xlu0 %v694
      %v726 = vpop.xlane.xlu0 %725
      %727 = vadd.xlane.f32.xlu0 %v696
      %v728 = vpop.xlane.xlu0 %727
      %729 = vadd.xlane.f32.xlu0 %v698
      %v730 = vpop.xlane.xlu0 %729
      %731 = vadd.xlane.f32.xlu0 %v700
      %v732 = vpop.xlane.xlu0 %731
      %733 = vadd.xlane.f32.xlu0 %v702
      %v734 = vpop.xlane.xlu0 %733
      %735 = vadd.xlane.f32.xlu0 %v704
      %v736 = vpop.xlane.xlu0 %735
      %737 = vadd.xlane.f32.xlu0 %v706
      %v738 = vpop.xlane.xlu0 %737
      %739 = vadd.xlane.f32.xlu0 %v708
      %v740 = vpop.xlane.xlu0 %739
      %741 = vadd.xlane.f32.xlu0 %v710
      %v742 = vpop.xlane.xlu0 %741
      %743 = vadd.xlane.f32.xlu0 %v712
      %v744 = vpop.xlane.xlu0 %743
      %745 = vadd.xlane.f32.xlu0 %v714
      %v746 = vpop.xlane.xlu0 %745
      %747 = vadd.xlane.f32.xlu0 %v716
      %v748 = vpop.xlane.xlu0 %747
      %749 = vadd.xlane.f32.xlu0 %v718
      %v750 = vpop.xlane.xlu0 %749
      %751 = vadd.xlane.f32.xlu0 %v720
      %v752 = vpop.xlane.xlu0 %751
      %v753 = vpack.c.bf16 %v692, %v690
      %v754 = vpack.c.bf16 %v696, %v694
      %v755 = vpack.c.bf16 %v700, %v698
      %v756 = vpack.c.bf16 %v704, %v702
      %v757 = vpack.c.bf16 %v708, %v706
      %v758 = vpack.c.bf16 %v712, %v710
      %v759 = vpack.c.bf16 %v716, %v714
      %v760 = vpack.c.bf16 %v720, %v718
      %v761 = vpack.c.bf16 %v403, %v402
      %v762 = vpack.c.bf16 %v405, %v404
      %v763 = vpack.c.bf16 %v407, %v406
      %v764 = vpack.c.bf16 %v409, %v408
      %v765 = vpack.c.bf16 %v411, %v410
      %v766 = vpack.c.bf16 %v413, %v412
      %v767 = vpack.c.bf16 %v415, %v414
      %v768 = vpack.c.bf16 %v417, %v416
      %769 = vmatprep.subr.bf16.mxu0 0
      %770 = vmatpush1.bf16.msra.mxu0 %v761
      %771 = vmatprep.subr.bf16.mxu0 0
      %772 = vmatpush1.bf16.msra.mxu0 %v762
      %773 = vmatprep.subr.bf16.mxu0 0
      %774 = vmatpush1.bf16.msra.mxu0 %v763
      %775 = vmatprep.subr.bf16.mxu0 0
      %776 = vmatpush1.bf16.msra.mxu0 %v764
      %777 = vmatprep.subr.bf16.mxu0 0
      %778 = vmatpush1.bf16.msra.mxu0 %v765
      %779 = vmatprep.subr.bf16.mxu0 0
      %780 = vmatpush1.bf16.msra.mxu0 %v766
      %781 = vmatprep.subr.bf16.mxu0 0
      %782 = vmatpush1.bf16.msra.mxu0 %v767
      %783 = vmatprep.subr.bf16.mxu0 0
      %784 = vmatpush1.bf16.msra.mxu0 %v768
      %785 = vmatprep.subr.bf16.mxu0 0
      %786 = vmatpush1.bf16.msra.mxu0 0
      %787 = vmatprep.subr.bf16.mxu0 0
      %788 = vmatpush1.bf16.msra.mxu0 0
      %789 = vmatprep.subr.bf16.mxu0 0
      %790 = vmatpush1.bf16.msra.mxu0 0
      %791 = vmatprep.subr.bf16.mxu0 0
      %792 = vmatpush1.bf16.msra.mxu0 0
      %793 = vmatprep.subr.bf16.mxu0 0
      %794 = vmatpush1.bf16.msra.mxu0 0
      %795 = vmatprep.subr.bf16.mxu0 0
      %796 = vmatpush1.bf16.msra.mxu0 0
      %797 = vmatprep.subr.bf16.mxu0 0
      %798 = vmatpush1.bf16.msra.mxu0 0
      %799 = vmatprep.subr.bf16.mxu0 0
      %800 = vmatpush1.bf16.msra.mxu0 0
      %801 = vmatprep.mubr.bf16.mxu0 0
      %802 = vmatmul.mubr.bf16.gmra.mrb[0].mxu0 %v753
      %v803 = vpop.f32.mrb[0].mxu0
      %v804 = vadd.f32 0.0, %v803
      %v805 = vpop.f32.mrb[0].mxu0
      %v806 = vpop.f32.mrb[0].mxu0
      %v807 = vadd.f32 0.0, %v806
      %v808 = vpop.f32.mrb[0].mxu0
      %809 = vmatprep.mubr.bf16.mxu0 0
      %810 = vmatmul.mubr.bf16.gmra.mrb[0].mxu0 %v754
      %v811 = vpop.f32.mrb[0].mxu0
      %v812 = vadd.f32 0.0, %v811
      %v813 = vpop.f32.mrb[0].mxu0
      %v814 = vpop.f32.mrb[0].mxu0
      %v815 = vadd.f32 0.0, %v814
      %v816 = vpop.f32.mrb[0].mxu0
      %817 = vmatprep.mubr.bf16.mxu0 0
      %818 = vmatmul.mubr.bf16.gmra.mrb[0].mxu0 %v755
      %v819 = vpop.f32.mrb[0].mxu0
      %v820 = vadd.f32 0.0, %v819
      %v821 = vpop.f32.mrb[0].mxu0
      %v822 = vpop.f32.mrb[0].mxu0
      %v823 = vadd.f32 0.0, %v822
      %v824 = vpop.f32.mrb[0].mxu0
      %825 = vmatprep.mubr.bf16.mxu0 0
      %826 = vmatmul.mubr.bf16.gmra.mrb[0].mxu0 %v756
      %v827 = vpop.f32.mrb[0].mxu0
      %v828 = vadd.f32 0.0, %v827
      %v829 = vpop.f32.mrb[0].mxu0
      %v830 = vpop.f32.mrb[0].mxu0
      %v831 = vadd.f32 0.0, %v830
      %v832 = vpop.f32.mrb[0].mxu0
      %833 = vmatprep.mubr.bf16.mxu0 0
      %834 = vmatmul.mubr.bf16.gmra.mrb[0].mxu0 %v757
      %v835 = vpop.f32.mrb[0].mxu0
      %v836 = vadd.f32 0.0, %v835
      %v837 = vpop.f32.mrb[0].mxu0
      %v838 = vpop.f32.mrb[0].mxu0
      %v839 = vadd.f32 0.0, %v838
      %v840 = vpop.f32.mrb[0].mxu0
      %841 = vmatprep.mubr.bf16.mxu0 0
      %842 = vmatmul.mubr.bf16.gmra.mrb[0].mxu0 %v758
      %v843 = vpop.f32.mrb[0].mxu0
      %v844 = vadd.f32 0.0, %v843
      %v845 = vpop.f32.mrb[0].mxu0
      %v846 = vpop.f32.mrb[0].mxu0
      %v847 = vadd.f32 0.0, %v846
      %v848 = vpop.f32.mrb[0].mxu0
      %849 = vmatprep.mubr.bf16.mxu0 0
      %850 = vmatmul.mubr.bf16.gmra.mrb[0].mxu0 %v759
      %v851 = vpop.f32.mrb[0].mxu0
      %v852 = vadd.f32 0.0, %v851
      %v853 = vpop.f32.mrb[0].mxu0
      %v854 = vpop.f32.mrb[0].mxu0
      %v855 = vadd.f32 0.0, %v854
      %v856 = vpop.f32.mrb[0].mxu0
      %857 = vmatprep.mubr.bf16.mxu0 0
      %858 = vmatmul.mubr.bf16.gmra.mrb[0].mxu0 %v760
      %v859 = vpop.f32.mrb[0].mxu0
      %v860 = vadd.f32 0.0, %v859
      %v861 = vpop.f32.mrb[0].mxu0
      %v862 = vpop.f32.mrb[0].mxu0
      %v863 = vadd.f32 0.0, %v862
      %v864 = vpop.f32.mrb[0].mxu0
      %865 = vdwg.mxu0
      %v866 = vrcp.pop %v722
      %v867 = vrcp.pop %v724
      %v868 = vrcp.pop %v726
      %v869 = vrcp.pop %v728
      %v870 = vrcp.pop %v730
      %v871 = vrcp.pop %v732
      %v872 = vrcp.pop %v734
      %v873 = vrcp.pop %v736
      %v874 = vrcp.pop %v738
      %v875 = vrcp.pop %v740
      %v876 = vrcp.pop %v742
      %v877 = vrcp.pop %v744
      %v878 = vrcp.pop %v746
      %v879 = vrcp.pop %v748
      %v880 = vrcp.pop %v750
      %v881 = vrcp.pop %v752
      %v882 = vmul.f32 %v804, %v866
      %v883 = vmul.f32 %v807, %v867
      %v884 = vmul.f32 %v812, %v868
      %v885 = vmul.f32 %v815, %v869
      %v886 = vmul.f32 %v820, %v870
      %v887 = vmul.f32 %v823, %v871
      %v888 = vmul.f32 %v828, %v872
      %v889 = vmul.f32 %v831, %v873
      %v890 = vmul.f32 %v836, %v874
      %v891 = vmul.f32 %v839, %v875
      %v892 = vmul.f32 %v844, %v876
      %v893 = vmul.f32 %v847, %v877
      %v894 = vmul.f32 %v852, %v878
      %v895 = vmul.f32 %v855, %v879
      %v896 = vmul.f32 %v860, %v880
      %v897 = vmul.f32 %v863, %v881
      %v898 = vld [vmem:[%s3] sm:$0x1]
      %v900 = vlaneseq
      %v901 = vshrl.u32 %v900, 7
      %v902 = vsub.s32 0, %v901
      %v903 = vrot.slane %v898, %v902
      %v905 = vadd.f32 %v882, %v903
      %v906 = vadd.f32 %v883, %v903
      %v907 = vadd.f32 %v884, %v903
      %v908 = vadd.f32 %v885, %v903
      %v909 = vadd.f32 %v886, %v903
      %v910 = vadd.f32 %v887, %v903
      %v911 = vadd.f32 %v888, %v903
      %v912 = vadd.f32 %v889, %v903
      %v913 = vadd.f32 %v890, %v903
      %v914 = vadd.f32 %v891, %v903
      %v915 = vadd.f32 %v892, %v903
      %v916 = vadd.f32 %v893, %v903
      %v917 = vadd.f32 %v894, %v903
      %v918 = vadd.f32 %v895, %v903
      %v919 = vadd.f32 %v896, %v903
      %v920 = vadd.f32 %v897, %v903
      %v921 = vmax.f32 %v905, 0.0
      %v922 = vmax.f32 %v906, 0.0
      %v923 = vmax.f32 %v907, 0.0
      %v924 = vmax.f32 %v908, 0.0
      %v925 = vmax.f32 %v909, 0.0
      %v926 = vmax.f32 %v910, 0.0
      %v927 = vmax.f32 %v911, 0.0
      %v928 = vmax.f32 %v912, 0.0
      %v929 = vmax.f32 %v913, 0.0
      %v930 = vmax.f32 %v914, 0.0
      %v931 = vmax.f32 %v915, 0.0
      %v932 = vmax.f32 %v916, 0.0
      %v933 = vmax.f32 %v917, 0.0
      %v934 = vmax.f32 %v918, 0.0
      %v935 = vmax.f32 %v919, 0.0
      %v936 = vmax.f32 %v920, 0.0
      %v937 = vpack.c.bf16 %v922, %v921
      %v938 = vpack.c.bf16 %v924, %v923
      %v939 = vpack.c.bf16 %v926, %v925
      %v940 = vpack.c.bf16 %v928, %v927
      %v941 = vpack.c.bf16 %v930, %v929
      %v942 = vpack.c.bf16 %v932, %v931
      %v943 = vpack.c.bf16 %v934, %v933
      %v944 = vpack.c.bf16 %v936, %v935
      %v945 = vld [vmem:[%s4] sm:$0xf]
      %v946 = vld [vmem:[%s4 + $0x4] sm:$0xf]
      %v947 = vld [vmem:[%s4 + $0x8] sm:$0xf]
      %v948 = vld [vmem:[%s4 + $0xc] sm:$0xf]
      %v949 = vld [vmem:[%s4 + $0x10] sm:$0xf]
      %v950 = vld [vmem:[%s4 + $0x14] sm:$0xf]
      %v951 = vld [vmem:[%s4 + $0x18] sm:$0xf]
      %v952 = vld [vmem:[%s4 + $0x1c] sm:$0xf]
      %v953 = vld [vmem:[%s4 + $0x20] sm:$0xf]
      %v954 = vld [vmem:[%s4 + $0x24] sm:$0xf]
      %v955 = vld [vmem:[%s4 + $0x28] sm:$0xf]
      %v956 = vld [vmem:[%s4 + $0x2c] sm:$0xf]
      %v957 = vld [vmem:[%s4 + $0x30] sm:$0xf]
      %v958 = vld [vmem:[%s4 + $0x34] sm:$0xf]
      %v959 = vld [vmem:[%s4 + $0x38] sm:$0xf]
      %v960 = vld [vmem:[%s4 + $0x3c] sm:$0xf]
      %v977 = vunpack.c.l.b16 %v945
      %v978 = vunpack.c.l.b16 %v946
      %v979 = vunpack.c.l.b16 %v947
      %v980 = vunpack.c.l.b16 %v948
      %v981 = vunpack.c.l.b16 %v949
      %v982 = vunpack.c.l.b16 %v950
      %v983 = vunpack.c.l.b16 %v951
      %v984 = vunpack.c.l.b16 %v952
      %v985 = vunpack.c.l.b16 %v953
      %v986 = vunpack.c.l.b16 %v954
      %v987 = vunpack.c.l.b16 %v955
      %v988 = vunpack.c.l.b16 %v956
      %v989 = vunpack.c.l.b16 %v957
      %v990 = vunpack.c.l.b16 %v958
      %v991 = vunpack.c.l.b16 %v959
      %v992 = vunpack.c.l.b16 %v960
      %v993 = vpack.c.b16 %v978, %v977
      %v994 = vpack.c.b16 %v980, %v979
      %v995 = vpack.c.b16 %v982, %v981
      %v996 = vpack.c.b16 %v984, %v983
      %v997 = vpack.c.b16 %v986, %v985
      %v998 = vpack.c.b16 %v988, %v987
      %v999 = vpack.c.b16 %v990, %v989
      %v1000 = vpack.c.b16 %v992, %v991
      %1009 = vmatprep.subr.bf16.mxu0 0
      %1010 = vmatpush1.bf16.msra.mxu0 %v993
      %1011 = vmatprep.subr.bf16.mxu0 0
      %1012 = vmatpush1.bf16.msra.mxu0 %v994
      %1013 = vmatprep.subr.bf16.mxu0 0
      %1014 = vmatpush1.bf16.msra.mxu0 %v995
      %1015 = vmatprep.subr.bf16.mxu0 0
      %1016 = vmatpush1.bf16.msra.mxu0 %v996
      %1017 = vmatprep.subr.bf16.mxu0 0
      %1018 = vmatpush1.bf16.msra.mxu0 %v997
      %1019 = vmatprep.subr.bf16.mxu0 0
      %1020 = vmatpush1.bf16.msra.mxu0 %v998
      %1021 = vmatprep.subr.bf16.mxu0 0
      %1022 = vmatpush1.bf16.msra.mxu0 %v999
      %1023 = vmatprep.subr.bf16.mxu0 0
      %1024 = vmatpush1.bf16.msra.mxu0 %v1000
      %1025 = vmatprep.subr.bf16.mxu0 0
      %1026 = vmatpush1.bf16.msra.mxu0 0
      %1027 = vmatprep.subr.bf16.mxu0 0
      %1028 = vmatpush1.bf16.msra.mxu0 0
      %1029 = vmatprep.subr.bf16.mxu0 0
      %1030 = vmatpush1.bf16.msra.mxu0 0
      %1031 = vmatprep.subr.bf16.mxu0 0
      %1032 = vmatpush1.bf16.msra.mxu0 0
      %1033 = vmatprep.subr.bf16.mxu0 0
      %1034 = vmatpush1.bf16.msra.mxu0 0
      %1035 = vmatprep.subr.bf16.mxu0 0
      %1036 = vmatpush1.bf16.msra.mxu0 0
      %1037 = vmatprep.subr.bf16.mxu0 0
      %1038 = vmatpush1.bf16.msra.mxu0 0
      %1039 = vmatprep.subr.bf16.mxu0 0
      %1040 = vmatpush1.bf16.msra.mxu0 0
      %1041 = vmatprep.mubr.bf16.mxu0 0
      %1042 = vmatmul.mubr.bf16.gmra.mrb[0].mxu0 %v937
      %v1043 = vpop.f32.mrb[0].mxu0
      %v1044 = vadd.f32 0.0, %v1043
      %v1045 = vpop.f32.mrb[0].mxu0
      %v1046 = vpop.f32.mrb[0].mxu0
      %v1047 = vadd.f32 0.0, %v1046
      %v1048 = vpop.f32.mrb[0].mxu0
      %1049 = vmatprep.mubr.bf16.mxu0 0
      %1050 = vmatmul.mubr.bf16.gmra.mrb[0].mxu0 %v938
      %v1051 = vpop.f32.mrb[0].mxu0
      %v1052 = vadd.f32 0.0, %v1051
      %v1053 = vpop.f32.mrb[0].mxu0
      %v1054 = vpop.f32.mrb[0].mxu0
      %v1055 = vadd.f32 0.0, %v1054
      %v1056 = vpop.f32.mrb[0].mxu0
      %1057 = vmatprep.mubr.bf16.mxu0 0
      %1058 = vmatmul.mubr.bf16.gmra.mrb[0].mxu0 %v939
      %v1059 = vpop.f32.mrb[0].mxu0
      %v1060 = vadd.f32 0.0, %v1059
      %v1061 = vpop.f32.mrb[0].mxu0
      %v1062 = vpop.f32.mrb[0].mxu0
      %v1063 = vadd.f32 0.0, %v1062
      %v1064 = vpop.f32.mrb[0].mxu0
      %1065 = vmatprep.mubr.bf16.mxu0 0
      %1066 = vmatmul.mubr.bf16.gmra.mrb[0].mxu0 %v940
      %v1067 = vpop.f32.mrb[0].mxu0
      %v1068 = vadd.f32 0.0, %v1067
      %v1069 = vpop.f32.mrb[0].mxu0
      %v1070 = vpop.f32.mrb[0].mxu0
      %v1071 = vadd.f32 0.0, %v1070
      %v1072 = vpop.f32.mrb[0].mxu0
      %1073 = vmatprep.mubr.bf16.mxu0 0
      %1074 = vmatmul.mubr.bf16.gmra.mrb[0].mxu0 %v941
      %v1075 = vpop.f32.mrb[0].mxu0
      %v1076 = vadd.f32 0.0, %v1075
      %v1077 = vpop.f32.mrb[0].mxu0
      %v1078 = vpop.f32.mrb[0].mxu0
      %v1079 = vadd.f32 0.0, %v1078
      %v1080 = vpop.f32.mrb[0].mxu0
      %1081 = vmatprep.mubr.bf16.mxu0 0
      %1082 = vmatmul.mubr.bf16.gmra.mrb[0].mxu0 %v942
      %v1083 = vpop.f32.mrb[0].mxu0
      %v1084 = vadd.f32 0.0, %v1083
      %v1085 = vpop.f32.mrb[0].mxu0
      %v1086 = vpop.f32.mrb[0].mxu0
      %v1087 = vadd.f32 0.0, %v1086
      %v1088 = vpop.f32.mrb[0].mxu0
      %1089 = vmatprep.mubr.bf16.mxu0 0
      %1090 = vmatmul.mubr.bf16.gmra.mrb[0].mxu0 %v943
      %v1091 = vpop.f32.mrb[0].mxu0
      %v1092 = vadd.f32 0.0, %v1091
      %v1093 = vpop.f32.mrb[0].mxu0
      %v1094 = vpop.f32.mrb[0].mxu0
      %v1095 = vadd.f32 0.0, %v1094
      %v1096 = vpop.f32.mrb[0].mxu0
      %1097 = vmatprep.mubr.bf16.mxu0 0
      %1098 = vmatmul.mubr.bf16.gmra.mrb[0].mxu0 %v944
      %v1099 = vpop.f32.mrb[0].mxu0
      %v1100 = vadd.f32 0.0, %v1099
      %v1101 = vpop.f32.mrb[0].mxu0
      %v1102 = vpop.f32.mrb[0].mxu0
      %v1103 = vadd.f32 0.0, %v1102
      %v1104 = vpop.f32.mrb[0].mxu0
      %1105 = vdwg.mxu0
      %vm1106 = vcmp.eq.s32.totalorder %v419, 5
      %v1107 = vsel %vm1106, 1, 0
      %v1108 = vcvt.s32.f32 %v1107
      %1109 = vmatprep.subr.mxu0 0.0
      %1110 = vmatpush1.xpose.msra.mxu0 %v1044
      %1111 = vmatprep.subr.mxu0 0.0
      %1112 = vmatpush1.xpose.msra.mxu0 %v1047
      %1113 = vmatprep.subr.mxu0 0.0
      %1114 = vmatpush1.xpose.msra.mxu0 %v1052
      %1115 = vmatprep.subr.mxu0 0.0
      %1116 = vmatpush1.xpose.msra.mxu0 %v1055
      %1117 = vmatprep.subr.mxu0 0.0
      %1118 = vmatpush1.xpose.msra.mxu0 %v1060
      %1119 = vmatprep.subr.mxu0 0.0
      %1120 = vmatpush1.xpose.msra.mxu0 %v1063
      %1121 = vmatprep.subr.mxu0 0.0
      %1122 = vmatpush1.xpose.msra.mxu0 %v1068
      %1123 = vmatprep.subr.mxu0 0.0
      %1124 = vmatpush1.xpose.msra.mxu0 %v1071
      %1125 = vmatprep.subr.mxu0 0.0
      %1126 = vmatpush1.xpose.msra.mxu0 %v1076
      %1127 = vmatprep.subr.mxu0 0.0
      %1128 = vmatpush1.xpose.msra.mxu0 %v1079
      %1129 = vmatprep.subr.mxu0 0.0
      %1130 = vmatpush1.xpose.msra.mxu0 %v1084
      %1131 = vmatprep.subr.mxu0 0.0
      %1132 = vmatpush1.xpose.msra.mxu0 %v1087
      %1133 = vmatprep.subr.mxu0 0.0
      %1134 = vmatpush1.xpose.msra.mxu0 %v1092
      %1135 = vmatprep.subr.mxu0 0.0
      %1136 = vmatpush1.xpose.msra.mxu0 %v1095
      %1137 = vmatprep.subr.mxu0 0.0
      %1138 = vmatpush1.xpose.msra.mxu0 %v1100
      %1139 = vmatprep.subr.mxu0 0.0
      %1140 = vmatpush1.xpose.msra.mxu0 %v1103
      %1141 = vmatprep.subr.mxu0 0.0
      %1142 = vmatpush1.xpose.msra.mxu0 0.0
      %1143 = vmatprep.subr.mxu0 0.0
      %1144 = vmatpush1.xpose.msra.mxu0 0.0
      %1145 = vmatprep.subr.mxu0 0.0
      %1146 = vmatpush1.xpose.msra.mxu0 0.0
      %1147 = vmatprep.subr.mxu0 0.0
      %1148 = vmatpush1.xpose.msra.mxu0 0.0
      %1149 = vmatprep.subr.mxu0 0.0
      %1150 = vmatpush1.xpose.msra.mxu0 0.0
      %1151 = vmatprep.subr.mxu0 0.0
      %1152 = vmatpush1.xpose.msra.mxu0 0.0
      %1153 = vmatprep.subr.mxu0 0.0
      %1154 = vmatpush1.xpose.msra.mxu0 0.0
      %1155 = vmatprep.subr.mxu0 0.0
      %1156 = vmatpush1.xpose.msra.mxu0 0.0
      %1157 = vmatprep.subr.mxu0 0.0
      %1158 = vmatpush1.xpose.msra.mxu0 0.0
      %1159 = vmatprep.subr.mxu0 0.0
      %1160 = vmatpush1.xpose.msra.mxu0 0.0
      %1161 = vmatprep.subr.mxu0 0.0
      %1162 = vmatpush1.xpose.msra.mxu0 0.0
      %1163 = vmatprep.subr.mxu0 0.0
      %1164 = vmatpush1.xpose.msra.mxu0 0.0
      %1165 = vmatprep.subr.mxu0 0.0
      %1166 = vmatpush1.xpose.msra.mxu0 0.0
      %1167 = vmatprep.subr.mxu0 0.0
      %1168 = vmatpush1.xpose.msra.mxu0 0.0
      %1169 = vmatprep.subr.mxu0 0.0
      %1170 = vmatpush1.xpose.msra.mxu0 0.0
      %1171 = vmatprep.subr.mxu0 0.0
      %1172 = vmatpush1.xpose.msra.mxu0 0.0
      %1173 = vmatprep.mubr.f32.mxu0 0.0
      %1174 = vmatmul.mubr.f32.gmra.mrb[0].mxu0 %v1108
      %v1175 = vpop.f32.mrb[0].mxu0
      %v1176 = vadd.f32 0.0, %v1175
      %v1177 = vpop.f32.mrb[0].mxu0
      %1178 = vdwg.mxu0
      %1180 = vset.pattern.permute.xlu0 6
      %1181 = vperm.xlu0 %1180, %v1044
      %v1182 = vpop.permute.xlu0 %1181
      %1185 = vset.pattern.permute.xlu0 6
      %1186 = vperm.xlu0 %1185, %v1047
      %v1187 = vpop.permute.xlu0 %1186
      %1190 = vset.pattern.permute.xlu0 6
      %1191 = vperm.xlu0 %1190, %v1052
      %v1192 = vpop.permute.xlu0 %1191
      %1195 = vset.pattern.permute.xlu0 6
      %1196 = vperm.xlu0 %1195, %v1055
      %v1197 = vpop.permute.xlu0 %1196
      %1200 = vset.pattern.permute.xlu0 6
      %1201 = vperm.xlu0 %1200, %v1060
      %v1202 = vpop.permute.xlu0 %1201
      %1205 = vset.pattern.permute.xlu0 6
      %1206 = vperm.xlu0 %1205, %v1063
      %v1207 = vpop.permute.xlu0 %1206
      %1210 = vset.pattern.permute.xlu0 6
      %1211 = vperm.xlu0 %1210, %v1068
      %v1212 = vpop.permute.xlu0 %1211
      %1215 = vset.pattern.permute.xlu0 6
      %1216 = vperm.xlu0 %1215, %v1071
      %v1217 = vpop.permute.xlu0 %1216
      %1220 = vset.pattern.permute.xlu0 6
      %1221 = vperm.xlu0 %1220, %v1076
      %v1222 = vpop.permute.xlu0 %1221
      %1225 = vset.pattern.permute.xlu0 6
      %1226 = vperm.xlu0 %1225, %v1079
      %v1227 = vpop.permute.xlu0 %1226
      %1230 = vset.pattern.permute.xlu0 6
      %1231 = vperm.xlu0 %1230, %v1084
      %v1232 = vpop.permute.xlu0 %1231
      %1235 = vset.pattern.permute.xlu0 6
      %1236 = vperm.xlu0 %1235, %v1087
      %v1237 = vpop.permute.xlu0 %1236
      %1240 = vset.pattern.permute.xlu0 6
      %1241 = vperm.xlu0 %1240, %v1092
      %v1242 = vpop.permute.xlu0 %1241
      %1245 = vset.pattern.permute.xlu0 6
      %1246 = vperm.xlu0 %1245, %v1095
      %v1247 = vpop.permute.xlu0 %1246
      %1250 = vset.pattern.permute.xlu0 6
      %1251 = vperm.xlu0 %1250, %v1100
      %v1252 = vpop.permute.xlu0 %1251
      %1255 = vset.pattern.permute.xlu0 6
      %1256 = vperm.xlu0 %1255, %v1103
      %v1257 = vpop.permute.xlu0 %1256
      %v1259 = vlaneseq
      %v1260 = vshrl.u32 %v1259, 7
      %v1261 = vsub.s32 0, %v1260
      %v1262 = vrot.slane %v1176, %v1261
      %v1263 = vadd.f32 %v1182, %v1262
      %v1264 = vadd.f32 %v1187, %v1262
      %v1265 = vadd.f32 %v1192, %v1262
      %v1266 = vadd.f32 %v1197, %v1262
      %v1267 = vadd.f32 %v1202, %v1262
      %v1268 = vadd.f32 %v1207, %v1262
      %v1269 = vadd.f32 %v1212, %v1262
      %v1270 = vadd.f32 %v1217, %v1262
      %v1271 = vadd.f32 %v1222, %v1262
      %v1272 = vadd.f32 %v1227, %v1262
      %v1273 = vadd.f32 %v1232, %v1262
      %v1274 = vadd.f32 %v1237, %v1262
      %v1275 = vadd.f32 %v1242, %v1262
      %v1276 = vadd.f32 %v1247, %v1262
      %v1277 = vadd.f32 %v1252, %v1262
      %v1278 = vadd.f32 %v1257, %v1262
      %v1279 = vmul.f32 %v1263, 0.2
      %v1280 = vmul.f32 %v1264, 0.2
      %v1281 = vmul.f32 %v1265, 0.2
      %v1282 = vmul.f32 %v1266, 0.2
      %v1283 = vmul.f32 %v1267, 0.2
      %v1284 = vmul.f32 %v1268, 0.2
      %v1285 = vmul.f32 %v1269, 0.2
      %v1286 = vmul.f32 %v1270, 0.2
      %v1287 = vmul.f32 %v1271, 0.2
      %v1288 = vmul.f32 %v1272, 0.2
      %v1289 = vmul.f32 %v1273, 0.2
      %v1290 = vmul.f32 %v1274, 0.2
      %v1291 = vmul.f32 %v1275, 0.2
      %v1292 = vmul.f32 %v1276, 0.2
      %v1293 = vmul.f32 %v1277, 0.2
      %v1294 = vmul.f32 %v1278, 0.2
      %v1295 = vmax.f32 %v1263, %v1279
      %v1296 = vmax.f32 %v1264, %v1280
      %v1297 = vmax.f32 %v1265, %v1281
      %v1298 = vmax.f32 %v1266, %v1282
      %v1299 = vmax.f32 %v1267, %v1283
      %v1300 = vmax.f32 %v1268, %v1284
      %v1301 = vmax.f32 %v1269, %v1285
      %v1302 = vmax.f32 %v1270, %v1286
      %v1303 = vmax.f32 %v1271, %v1287
      %v1304 = vmax.f32 %v1272, %v1288
      %v1305 = vmax.f32 %v1273, %v1289
      %v1306 = vmax.f32 %v1274, %v1290
      %v1307 = vmax.f32 %v1275, %v1291
      %v1308 = vmax.f32 %v1276, %v1292
      %v1309 = vmax.f32 %v1277, %v1293
      %v1310 = vmax.f32 %v1278, %v1294
      %v1311 = vadd.f32 %v1295, %v386
      %v1312 = vadd.f32 %v1296, %v387
      %v1313 = vadd.f32 %v1297, %v388
      %v1314 = vadd.f32 %v1298, %v389
      %v1315 = vadd.f32 %v1299, %v390
      %v1316 = vadd.f32 %v1300, %v391
      %v1317 = vadd.f32 %v1301, %v392
      %v1318 = vadd.f32 %v1302, %v393
      %v1319 = vadd.f32 %v1303, %v394
      %v1320 = vadd.f32 %v1304, %v395
      %v1321 = vadd.f32 %v1305, %v396
      %v1322 = vadd.f32 %v1306, %v397
      %v1323 = vadd.f32 %v1307, %v398
      %v1324 = vadd.f32 %v1308, %v399
      %v1325 = vadd.f32 %v1309, %v400
      %v1326 = vadd.f32 %v1310, %v401
      %1327 = vmax.xlane.f32.xlu0 %v1311
      %v1328 = vpop.xlane.xlu0 %1327
      %1329 = vmax.xlane.f32.xlu0 %v1312
      %v1330 = vpop.xlane.xlu0 %1329
      %1331 = vmax.xlane.f32.xlu0 %v1313
      %v1332 = vpop.xlane.xlu0 %1331
      %1333 = vmax.xlane.f32.xlu0 %v1314
      %v1334 = vpop.xlane.xlu0 %1333
      %1335 = vmax.xlane.f32.xlu0 %v1315
      %v1336 = vpop.xlane.xlu0 %1335
      %1337 = vmax.xlane.f32.xlu0 %v1316
      %v1338 = vpop.xlane.xlu0 %1337
      %1339 = vmax.xlane.f32.xlu0 %v1317
      %v1340 = vpop.xlane.xlu0 %1339
      %1341 = vmax.xlane.f32.xlu0 %v1318
      %v1342 = vpop.xlane.xlu0 %1341
      %1343 = vmax.xlane.f32.xlu0 %v1319
      %v1344 = vpop.xlane.xlu0 %1343
      %1345 = vmax.xlane.f32.xlu0 %v1320
      %v1346 = vpop.xlane.xlu0 %1345
      %1347 = vmax.xlane.f32.xlu0 %v1321
      %v1348 = vpop.xlane.xlu0 %1347
      %1349 = vmax.xlane.f32.xlu0 %v1322
      %v1350 = vpop.xlane.xlu0 %1349
      %1351 = vmax.xlane.f32.xlu0 %v1323
      %v1352 = vpop.xlane.xlu0 %1351
      %1353 = vmax.xlane.f32.xlu0 %v1324
      %v1354 = vpop.xlane.xlu0 %1353
      %1355 = vmax.xlane.f32.xlu0 %v1325
      %v1356 = vpop.xlane.xlu0 %1355
      %1357 = vmax.xlane.f32.xlu0 %v1326
      %v1358 = vpop.xlane.xlu0 %1357
      %v1359 = vsub.f32 %v1311, %v1328
      %v1360 = vsub.f32 %v1312, %v1330
      %v1361 = vsub.f32 %v1313, %v1332
      %v1362 = vsub.f32 %v1314, %v1334
      %v1363 = vsub.f32 %v1315, %v1336
      %v1364 = vsub.f32 %v1316, %v1338
      %v1365 = vsub.f32 %v1317, %v1340
      %v1366 = vsub.f32 %v1318, %v1342
      %v1367 = vsub.f32 %v1319, %v1344
      %v1368 = vsub.f32 %v1320, %v1346
      %v1369 = vsub.f32 %v1321, %v1348
      %v1370 = vsub.f32 %v1322, %v1350
      %v1371 = vsub.f32 %v1323, %v1352
      %v1372 = vsub.f32 %v1324, %v1354
      %v1373 = vsub.f32 %v1325, %v1356
      %v1374 = vsub.f32 %v1326, %v1358
      %v1375 = vmul.f32 %v1359, 1.442695
      %v1376 = vpow.pop %v1375
      %v1377 = vmul.f32 %v1360, 1.442695
      %v1378 = vpow.pop %v1377
      %v1379 = vmul.f32 %v1361, 1.442695
      %v1380 = vpow.pop %v1379
      %v1381 = vmul.f32 %v1362, 1.442695
      %v1382 = vpow.pop %v1381
      %v1383 = vmul.f32 %v1363, 1.442695
      %v1384 = vpow.pop %v1383
      %v1385 = vmul.f32 %v1364, 1.442695
      %v1386 = vpow.pop %v1385
      %v1387 = vmul.f32 %v1365, 1.442695
      %v1388 = vpow.pop %v1387
      %v1389 = vmul.f32 %v1366, 1.442695
      %v1390 = vpow.pop %v1389
      %v1391 = vmul.f32 %v1367, 1.442695
      %v1392 = vpow.pop %v1391
      %v1393 = vmul.f32 %v1368, 1.442695
      %v1394 = vpow.pop %v1393
      %v1395 = vmul.f32 %v1369, 1.442695
      %v1396 = vpow.pop %v1395
      %v1397 = vmul.f32 %v1370, 1.442695
      %v1398 = vpow.pop %v1397
      %v1399 = vmul.f32 %v1371, 1.442695
      %v1400 = vpow.pop %v1399
      %v1401 = vmul.f32 %v1372, 1.442695
      %v1402 = vpow.pop %v1401
      %v1403 = vmul.f32 %v1373, 1.442695
      %v1404 = vpow.pop %v1403
      %v1405 = vmul.f32 %v1374, 1.442695
      %v1406 = vpow.pop %v1405
      %1407 = vadd.xlane.f32.xlu0 %v1376
      %v1408 = vpop.xlane.xlu0 %1407
      %1409 = vadd.xlane.f32.xlu0 %v1378
      %v1410 = vpop.xlane.xlu0 %1409
      %1411 = vadd.xlane.f32.xlu0 %v1380
      %v1412 = vpop.xlane.xlu0 %1411
      %1413 = vadd.xlane.f32.xlu0 %v1382
      %v1414 = vpop.xlane.xlu0 %1413
      %1415 = vadd.xlane.f32.xlu0 %v1384
      %v1416 = vpop.xlane.xlu0 %1415
      %1417 = vadd.xlane.f32.xlu0 %v1386
      %v1418 = vpop.xlane.xlu0 %1417
      %1419 = vadd.xlane.f32.xlu0 %v1388
      %v1420 = vpop.xlane.xlu0 %1419
      %1421 = vadd.xlane.f32.xlu0 %v1390
      %v1422 = vpop.xlane.xlu0 %1421
      %1423 = vadd.xlane.f32.xlu0 %v1392
      %v1424 = vpop.xlane.xlu0 %1423
      %1425 = vadd.xlane.f32.xlu0 %v1394
      %v1426 = vpop.xlane.xlu0 %1425
      %1427 = vadd.xlane.f32.xlu0 %v1396
      %v1428 = vpop.xlane.xlu0 %1427
      %1429 = vadd.xlane.f32.xlu0 %v1398
      %v1430 = vpop.xlane.xlu0 %1429
      %1431 = vadd.xlane.f32.xlu0 %v1400
      %v1432 = vpop.xlane.xlu0 %1431
      %1433 = vadd.xlane.f32.xlu0 %v1402
      %v1434 = vpop.xlane.xlu0 %1433
      %1435 = vadd.xlane.f32.xlu0 %v1404
      %v1436 = vpop.xlane.xlu0 %1435
      %1437 = vadd.xlane.f32.xlu0 %v1406
      %v1438 = vpop.xlane.xlu0 %1437
      %v1439 = vpack.c.bf16 %v1378, %v1376
      %v1440 = vpack.c.bf16 %v1382, %v1380
      %v1441 = vpack.c.bf16 %v1386, %v1384
      %v1442 = vpack.c.bf16 %v1390, %v1388
      %v1443 = vpack.c.bf16 %v1394, %v1392
      %v1444 = vpack.c.bf16 %v1398, %v1396
      %v1445 = vpack.c.bf16 %v1402, %v1400
      %v1446 = vpack.c.bf16 %v1406, %v1404
      %v1447 = vpack.c.bf16 %v1047, %v1044
      %v1448 = vpack.c.bf16 %v1055, %v1052
      %v1449 = vpack.c.bf16 %v1063, %v1060
      %v1450 = vpack.c.bf16 %v1071, %v1068
      %v1451 = vpack.c.bf16 %v1079, %v1076
      %v1452 = vpack.c.bf16 %v1087, %v1084
      %v1453 = vpack.c.bf16 %v1095, %v1092
      %v1454 = vpack.c.bf16 %v1103, %v1100
      %1455 = vmatprep.subr.bf16.mxu0 0
      %1456 = vmatpush1.bf16.msra.mxu0 %v1447
      %1457 = vmatprep.subr.bf16.mxu0 0
      %1458 = vmatpush1.bf16.msra.mxu0 %v1448
      %1459 = vmatprep.subr.bf16.mxu0 0
      %1460 = vmatpush1.bf16.msra.mxu0 %v1449
      %1461 = vmatprep.subr.bf16.mxu0 0
      %1462 = vmatpush1.bf16.msra.mxu0 %v1450
      %1463 = vmatprep.subr.bf16.mxu0 0
      %1464 = vmatpush1.bf16.msra.mxu0 %v1451
      %1465 = vmatprep.subr.bf16.mxu0 0
      %1466 = vmatpush1.bf16.msra.mxu0 %v1452
      %1467 = vmatprep.subr.bf16.mxu0 0
      %1468 = vmatpush1.bf16.msra.mxu0 %v1453
      %1469 = vmatprep.subr.bf16.mxu0 0
      %1470 = vmatpush1.bf16.msra.mxu0 %v1454
      %1471 = vmatprep.subr.bf16.mxu0 0
      %1472 = vmatpush1.bf16.msra.mxu0 0
      %1473 = vmatprep.subr.bf16.mxu0 0
      %1474 = vmatpush1.bf16.msra.mxu0 0
      %1475 = vmatprep.subr.bf16.mxu0 0
      %1476 = vmatpush1.bf16.msra.mxu0 0
      %1477 = vmatprep.subr.bf16.mxu0 0
      %1478 = vmatpush1.bf16.msra.mxu0 0
      %1479 = vmatprep.subr.bf16.mxu0 0
      %1480 = vmatpush1.bf16.msra.mxu0 0
      %1481 = vmatprep.subr.bf16.mxu0 0
      %1482 = vmatpush1.bf16.msra.mxu0 0
      %1483 = vmatprep.subr.bf16.mxu0 0
      %1484 = vmatpush1.bf16.msra.mxu0 0
      %1485 = vmatprep.subr.bf16.mxu0 0
      %1486 = vmatpush1.bf16.msra.mxu0 0
      %1487 = vmatprep.mubr.bf16.mxu0 0
      %1488 = vmatmul.mubr.bf16.gmra.mrb[0].mxu0 %v1439
      %v1489 = vpop.f32.mrb[0].mxu0
      %v1490 = vadd.f32 0.0, %v1489
      %v1491 = vpop.f32.mrb[0].mxu0
      %v1492 = vpop.f32.mrb[0].mxu0
      %v1493 = vadd.f32 0.0, %v1492
      %v1494 = vpop.f32.mrb[0].mxu0
      %1495 = vmatprep.mubr.bf16.mxu0 0
      %1496 = vmatmul.mubr.bf16.gmra.mrb[0].mxu0 %v1440
      %v1497 = vpop.f32.mrb[0].mxu0
      %v1498 = vadd.f32 0.0, %v1497
      %v1499 = vpop.f32.mrb[0].mxu0
      %v1500 = vpop.f32.mrb[0].mxu0
      %v1501 = vadd.f32 0.0, %v1500
      %v1502 = vpop.f32.mrb[0].mxu0
      %1503 = vmatprep.mubr.bf16.mxu0 0
      %1504 = vmatmul.mubr.bf16.gmra.mrb[0].mxu0 %v1441
      %v1505 = vpop.f32.mrb[0].mxu0
      %v1506 = vadd.f32 0.0, %v1505
      %v1507 = vpop.f32.mrb[0].mxu0
      %v1508 = vpop.f32.mrb[0].mxu0
      %v1509 = vadd.f32 0.0, %v1508
      %v1510 = vpop.f32.mrb[0].mxu0
      %1511 = vmatprep.mubr.bf16.mxu0 0
      %1512 = vmatmul.mubr.bf16.gmra.mrb[0].mxu0 %v1442
      %v1513 = vpop.f32.mrb[0].mxu0
      %v1514 = vadd.f32 0.0, %v1513
      %v1515 = vpop.f32.mrb[0].mxu0
      %v1516 = vpop.f32.mrb[0].mxu0
      %v1517 = vadd.f32 0.0, %v1516
      %v1518 = vpop.f32.mrb[0].mxu0
      %1519 = vmatprep.mubr.bf16.mxu0 0
      %1520 = vmatmul.mubr.bf16.gmra.mrb[0].mxu0 %v1443
      %v1521 = vpop.f32.mrb[0].mxu0
      %v1522 = vadd.f32 0.0, %v1521
      %v1523 = vpop.f32.mrb[0].mxu0
      %v1524 = vpop.f32.mrb[0].mxu0
      %v1525 = vadd.f32 0.0, %v1524
      %v1526 = vpop.f32.mrb[0].mxu0
      %1527 = vmatprep.mubr.bf16.mxu0 0
      %1528 = vmatmul.mubr.bf16.gmra.mrb[0].mxu0 %v1444
      %v1529 = vpop.f32.mrb[0].mxu0
      %v1530 = vadd.f32 0.0, %v1529
      %v1531 = vpop.f32.mrb[0].mxu0
      %v1532 = vpop.f32.mrb[0].mxu0
      %v1533 = vadd.f32 0.0, %v1532
      %v1534 = vpop.f32.mrb[0].mxu0
      %1535 = vmatprep.mubr.bf16.mxu0 0
      %1536 = vmatmul.mubr.bf16.gmra.mrb[0].mxu0 %v1445
      %v1537 = vpop.f32.mrb[0].mxu0
      %v1538 = vadd.f32 0.0, %v1537
      %v1539 = vpop.f32.mrb[0].mxu0
      %v1540 = vpop.f32.mrb[0].mxu0
      %v1541 = vadd.f32 0.0, %v1540
      %v1542 = vpop.f32.mrb[0].mxu0
      %1543 = vmatprep.mubr.bf16.mxu0 0
      %1544 = vmatmul.mubr.bf16.gmra.mrb[0].mxu0 %v1446
      %v1545 = vpop.f32.mrb[0].mxu0
      %v1546 = vadd.f32 0.0, %v1545
      %v1547 = vpop.f32.mrb[0].mxu0
      %v1548 = vpop.f32.mrb[0].mxu0
      %v1549 = vadd.f32 0.0, %v1548
      %v1550 = vpop.f32.mrb[0].mxu0
      %1551 = vdwg.mxu0
      %v1552 = vrcp.pop %v1408
      %v1553 = vrcp.pop %v1410
      %v1554 = vrcp.pop %v1412
      %v1555 = vrcp.pop %v1414
      %v1556 = vrcp.pop %v1416
      %v1557 = vrcp.pop %v1418
      %v1558 = vrcp.pop %v1420
      %v1559 = vrcp.pop %v1422
      %v1560 = vrcp.pop %v1424
      %v1561 = vrcp.pop %v1426
      %v1562 = vrcp.pop %v1428
      %v1563 = vrcp.pop %v1430
      %v1564 = vrcp.pop %v1432
      %v1565 = vrcp.pop %v1434
      %v1566 = vrcp.pop %v1436
      %v1567 = vrcp.pop %v1438
      %v1568 = vmul.f32 %v1490, %v1552
      %v1569 = vmul.f32 %v1493, %v1553
      %v1570 = vmul.f32 %v1498, %v1554
      %v1571 = vmul.f32 %v1501, %v1555
      %v1572 = vmul.f32 %v1506, %v1556
      %v1573 = vmul.f32 %v1509, %v1557
      %v1574 = vmul.f32 %v1514, %v1558
      %v1575 = vmul.f32 %v1517, %v1559
      %v1576 = vmul.f32 %v1522, %v1560
      %v1577 = vmul.f32 %v1525, %v1561
      %v1578 = vmul.f32 %v1530, %v1562
      %v1579 = vmul.f32 %v1533, %v1563
      %v1580 = vmul.f32 %v1538, %v1564
      %v1581 = vmul.f32 %v1541, %v1565
      %v1582 = vmul.f32 %v1546, %v1566
      %v1583 = vmul.f32 %v1549, %v1567
      %v1584 = vld [vmem:[%s5] sm:$0x1]
      %v1586 = vlaneseq
      %v1587 = vshrl.u32 %v1586, 7
      %v1588 = vsub.s32 0, %v1587
      %v1589 = vrot.slane %v1584, %v1588
      %v1591 = vadd.f32 %v1568, %v1589
      %v1592 = vadd.f32 %v1569, %v1589
      %v1593 = vadd.f32 %v1570, %v1589
      %v1594 = vadd.f32 %v1571, %v1589
      %v1595 = vadd.f32 %v1572, %v1589
      %v1596 = vadd.f32 %v1573, %v1589
      %v1597 = vadd.f32 %v1574, %v1589
      %v1598 = vadd.f32 %v1575, %v1589
      %v1599 = vadd.f32 %v1576, %v1589
      %v1600 = vadd.f32 %v1577, %v1589
      %v1601 = vadd.f32 %v1578, %v1589
      %v1602 = vadd.f32 %v1579, %v1589
      %v1603 = vadd.f32 %v1580, %v1589
      %v1604 = vadd.f32 %v1581, %v1589
      %v1605 = vadd.f32 %v1582, %v1589
      %v1606 = vadd.f32 %v1583, %v1589
      %1607 = vst [vmem:[%s6] sm:$0xff] %v1591
      %1608 = vst [vmem:[%s6 + $0x8] sm:$0xff] %v1592
      %1609 = vst [vmem:[%s6 + $0x10] sm:$0xff] %v1593
      %1610 = vst [vmem:[%s6 + $0x18] sm:$0xff] %v1594
      %1611 = vst [vmem:[%s6 + $0x20] sm:$0xff] %v1595
      %1612 = vst [vmem:[%s6 + $0x28] sm:$0xff] %v1596
      %1613 = vst [vmem:[%s6 + $0x30] sm:$0xff] %v1597
      %1614 = vst [vmem:[%s6 + $0x38] sm:$0xff] %v1598
      %1615 = vst [vmem:[%s6 + $0x40] sm:$0xff] %v1599
      %1616 = vst [vmem:[%s6 + $0x48] sm:$0xff] %v1600
      %1617 = vst [vmem:[%s6 + $0x50] sm:$0xff] %v1601
      %1618 = vst [vmem:[%s6 + $0x58] sm:$0xff] %v1602
      %1619 = vst [vmem:[%s6 + $0x60] sm:$0xff] %v1603
      %1620 = vst [vmem:[%s6 + $0x68] sm:$0xff] %v1604
      %1621 = vst [vmem:[%s6 + $0x70] sm:$0xff] %v1605
      %1622 = vst [vmem:[%s6 + $0x78] sm:$0xff] %v1606
    $region37: #{gat_forward.1} parent=1 // pred_fallthru
      _
    // Predicated region
    $region38: #{gat_forward.1} parent=1 // pred_check
      _
    $region39: #{gat_forward.1} parent=1 // pred_check_branch
      %1624 = sbr.rel (0) target = $region41
    $region40: #{gat_forward.1} parent=1 // pred_region
      _
    $region41: #{gat_forward.1} parent=1 // pred_fallthru
      _
    // Predicated region
    $region42: #{gat_forward.1} parent=1 // pred_check
      _
    $region43: #{gat_forward.1} parent=1 // pred_check_branch
      %1626 = sbr.rel (0) target = $region45
    $region44: #{gat_forward.1} parent=1 // pred_region
      _
    $region45: #{gat_forward.1} parent=1 // pred_fallthru
      _
    %1627 = vsyncpa [#allocation4], 1

</llo_original>
